<compile_context>
chip_gen: v6e
topology: v6e:2x2x1
jax: 0.10.0
libtpu: 0.0.40
codegen_flags: <defaults>
</compile_context>

<pallas_src>
import functools

import jax
import jax.numpy as jnp
from jax import lax
from jax.experimental import pallas as pl
from jax.experimental.pallas import tpu as pltpu


def _round_up(x, m):
    return ((x + m - 1) // m) * m


# ----------------------------------------------------------------------------
# Fused kernel body.  grid = (T,): one step per grid iteration, hidden state
# carried in h_ref (constant output block index -> VMEM resident).
# ----------------------------------------------------------------------------
def _fused_kernel(z_ref, ct_ref, cn_ref, obs_ref, h0_ref,
                  w1_ref, wslab_ref, bslab_ref,
                  q_ref, h_ref,
                  *, n_agents, n_actions, n_hidden_total):
    N, HP = h_ref.shape                     # rows, padded hidden-stack width (mult of 128)
    QP = q_ref.shape[-1]                    # padded q-slab width (mult of 128)
    bs = z_ref.shape[0]
    K = ct_ref.shape[-1]                    # n_sub_modules
    A = n_actions
    GW = 3 * HP                             # gate-block width [r|z|n], each HP wide

    # ---- t == 0: initialise the recurrent carry from the caller's hidden ----
    @pl.when(pl.program_id(0) == 0)
    def _init():
        h_ref[...] = h0_ref[...]

    # ---- kmeans.predict on this step's z (batch granularity) ---------------
    # argmin_k ||z - c_k||^2 == argmin_k (||c_k||^2 - 2 z.c_k); ||z||^2 is a
    # per-row constant and dropped.  c_t / c_norm are precomputed inputs.
    z = z_ref[...]                                                  # (bs, Z) f32
    score = cn_ref[...] - 2.0 * jnp.dot(z, ct_ref[...],
                                        preferred_element_type=jnp.float32)   # (bs, K)
    min_s = jnp.min(score, axis=-1, keepdims=True)
    k_iota = lax.broadcasted_iota(jnp.int32, score.shape, 1)
    # first-index argmin (kmeans.predict tie-break); all-NaN rows fall through
    # to the zero pad lanes of the q slab (same silent-zero behaviour as before).
    chosen = jnp.min(jnp.where(score <= min_s, k_iota, K),
                     axis=-1, keepdims=True)                        # (bs, 1) int32

    # Per-batch lane-selection mask over the packed q lanes, expanded to rows
    # with a tiny (N, bs) x (bs, QP) matmul (no sublane gather / jnp.repeat).
    col = lax.broadcasted_iota(jnp.int32, (bs, QP), 1)
    lo = chosen * A
    mask_b = ((col >= lo) & (col < lo + A)).astype(jnp.float32)     # (bs, QP)
    r_iota = lax.broadcasted_iota(jnp.int32, (N, bs), 0)
    b_iota = lax.broadcasted_iota(jnp.int32, (N, bs), 1)
    expand = ((r_iota >= b_iota * n_agents) &
              (r_iota < (b_iota + 1) * n_agents)).astype(jnp.float32)   # (N, bs)
    mask_rows = jnp.dot(expand, mask_b,
                        preferred_element_type=jnp.float32)          # (N, QP)

    # ---- all sub-modules fused via block-diagonal packed weights -----------
    obs = obs_ref[...]                                               # (N, Din) bf16
    h = h_ref[...]                                                   # (N, HP) f32
    h_bf = h.astype(jnp.bfloat16)

    b1 = bslab_ref[:, 0:HP]
    bih = bslab_ref[:, HP:HP + GW]
    bhh = bslab_ref[:, HP + GW:HP + 2 * GW]
    b2 = bslab_ref[:, HP + 2 * GW:HP + 2 * GW + QP]

    # fc1 + ReLU for every sub-module in one dot (obs shared across subs).
    x = jnp.dot(obs, w1_ref[...], preferred_element_type=jnp.float32) + b1
    x = jnp.maximum(x, 0.0)                                          # (N, HP)
    x_bf = x.astype(jnp.bfloat16)

    # GRUCell gates, all sub-modules at once.  Column layout [r|z|n], each HP
    # wide -> every slice below is 128-lane aligned (pure vreg selection).
    gi = jnp.dot(x_bf, wslab_ref[:, 0:GW],
                 preferred_element_type=jnp.float32) + bih            # (N, 3*HP)
    gh = jnp.dot(h_bf, wslab_ref[:, GW:2 * GW],
                 preferred_element_type=jnp.float32) + bhh            # (N, 3*HP)

    rz = jax.nn.sigmoid(gi[:, :2 * HP] + gh[:, :2 * HP])              # one sigmoid, (N, 2*HP)
    r = rz[:, :HP]
    u = rz[:, HP:]
    n = jnp.tanh(gi[:, 2 * HP:] + r * gh[:, 2 * HP:])                 # one tanh, (N, HP)
    h_new = (1.0 - u) * n + u * h                                     # (N, HP) f32
    if n_hidden_total != HP:
        # keep pad lanes of the carry exactly zero (robust to garbage pads).
        pad_mask = (lax.broadcasted_iota(jnp.int32, (N, HP), 1)
                    < n_hidden_total).astype(jnp.float32)
        h_new = h_new * pad_mask
    h_ref[...] = h_new                                                # full-tile store

    # fc2 (block-diagonal) + chosen-policy masking; q slab is lane-dense.
    q_all = jnp.dot(h_new.astype(jnp.bfloat16), wslab_ref[:, 2 * GW:2 * GW + QP],
                    preferred_element_type=jnp.float32) + b2          # (N, QP)
    q_ref[...] = q_all * mask_rows                                    # full-tile store


# ----------------------------------------------------------------------------
# Fused multi-step forward (T env steps in one pallas_call).
# ----------------------------------------------------------------------------
@functools.partial(jax.jit, static_argnames=("n_agents", "n_actions", "hidden_dim"))
def kmeans_rnn_agent_forward(obs_seq, z_seq, h_in, params, kmeans_consts,
                             *, n_agents, n_actions, hidden_dim):
    """obs_seq: (T, bs*n_agents, Din); z_seq: (T, bs, Z); h_in: (bs*n_agents, HP).

    Returns ({'q': (T, bs*n_agents, n_actions)}, h_out packed (bs*n_agents, HP)).
    """
    T, N, Din = obs_seq.shape
    bs, Zd = z_seq.shape[1], z_seq.shape[2]
    HP = h_in.shape[-1]
    K = kmeans_consts["c_t"].shape[-1]
    WC = params["wslab"].shape[-1]
    BC = params["bslab"].shape[-1]
    QP = WC - 6 * HP
    HS = K * hidden_dim

    kernel = functools.partial(_fused_kernel, n_agents=n_agents,
                               n_actions=n_actions, n_hidden_total=HS)

    q_slab, h_out = pl.pallas_call(
        kernel,
        grid=(T,),
        in_specs=[
            pl.BlockSpec((None, bs, Zd), lambda t: (t, 0, 0)),    # z_t
            pl.BlockSpec((Zd, K), lambda t: (0, 0)),              # centroids^T (resident)
            pl.BlockSpec((1, K), lambda t: (0, 0)),               # ||c||^2     (resident)
            pl.BlockSpec((None, N, Din), lambda t: (t, 0, 0)),    # obs_t
            pl.BlockSpec((N, HP), lambda t: (0, 0)),              # h_in        (resident)
            pl.BlockSpec((Din, HP), lambda t: (0, 0)),            # W1 slab     (resident)
            pl.BlockSpec((HP, WC), lambda t: (0, 0)),             # Wih|Whh|W2  (resident)
            pl.BlockSpec((1, BC), lambda t: (0, 0)),              # bias slab   (resident)
        ],
        out_specs=(
            pl.BlockSpec((None, N, QP), lambda t: (t, 0, 0)),     # q slab per step
            pl.BlockSpec((N, HP), lambda t: (0, 0)),              # final hidden carry
        ),
        out_shape=(
            jax.ShapeDtypeStruct((T, N, QP), jnp.float32),
            jax.ShapeDtypeStruct((N, HP), jnp.float32),
        ),
        input_output_aliases={4: 1},                               # h_in buffer -> h_out
        compiler_params=pltpu.CompilerParams(
            dimension_semantics=("arbitrary",)),                   # sequential in T (h carry)
    )(z_seq.astype(jnp.float32),
      kmeans_consts["c_t"], kmeans_consts["c_norm"],
      obs_seq.astype(jnp.bfloat16),
      h_in.astype(jnp.float32),
      params["w1"], params["wslab"], params["bslab"])

    # Compact the lane-dense masked q slab: only the chosen sub-module's A-lane
    # group is non-zero per row, so a group-sum recovers the selected q.
    q = q_slab[:, :, :K * n_actions].reshape(T, N, K, n_actions).sum(axis=2)
    # TODO(synk): on v7x, once N (or a rollout batch axis) scales, add a leading
    # "parallel" grid axis over row tiles so the second TensorCore is used, and
    # budget block sizes against 64 MiB VMEM.
    return {"q": q}, h_out


def kmeans_rnn_agent_step(obs, z, h_in, params, kmeans_consts,
                          *, n_agents, n_actions, hidden_dim):
    """Original per-environment-step API (T == 1)."""
    out, h = kmeans_rnn_agent_forward(obs[None], z[None], h_in, params, kmeans_consts,
                                      n_agents=n_agents, n_actions=n_actions,
                                      hidden_dim=hidden_dim)
    return {"q": out["q"][0]}, h


# ----------------------------------------------------------------------------
# Setup helpers (analogues of set_dataset / init_hidden) and parameter packing.
# ----------------------------------------------------------------------------
def prepare_kmeans(centroids):
    """Precompute kmeans constants ONCE (not in the per-step path)."""
    c = centroids.astype(jnp.float32)
    return {"c_t": c.T, "c_norm": jnp.sum(c * c, axis=-1)[None, :]}


def hidden_width(n_sub, hidden_dim):
    return _round_up(n_sub * hidden_dim, 128)


def init_hidden(bs, n_agents, n_sub, hidden_dim):
    return jnp.zeros((bs * n_agents, hidden_width(n_sub, hidden_dim)), jnp.float32)


def split_hidden(h_packed, n_sub, hidden_dim):
    """Unpack the lane-packed hidden carry into the module's per-sub list."""
    return [h_packed[:, s * hidden_dim:(s + 1) * hidden_dim] for s in range(n_sub)]


def make_params(key, n_sub, input_dim, hidden_dim, n_actions):
    """Deterministic synthetic params, packed into block-diagonal padded slabs.

    Returns (packed_params, raw_per_sub_params).  Gate order along the packed
    gate axis is (r, z, n), each gate block padded to 128 lanes.
    """
    H, A, K = hidden_dim, n_actions, n_sub
    HP = _round_up(K * H, 128)
    QP = _round_up(K * A, 128)
    ks = jax.random.split(key, 8)

    def u(k, shape, fan):
        lim = 1.0 / (float(fan) ** 0.5)
        return jax.random.uniform(k, shape, jnp.float32, -lim, lim)

    raw = {
        "w1":  u(ks[0], (K, input_dim, H), input_dim),
        "b1":  u(ks[1], (K, H), input_dim),
        "wih": u(ks[2], (K, H, 3 * H), H),   # x @ W layout, gates (r,z,n) on last axis
        "bih": u(ks[3], (K, 3 * H), H),
        "whh": u(ks[4], (K, H, 3 * H), H),
        "bhh": u(ks[5], (K, 3 * H), H),
        "w2":  u(ks[6], (K, H, A), H),
        "b2":  u(ks[7], (K, A), H),
    }

    W1 = jnp.zeros((input_dim, HP), jnp.float32)
    b1 = jnp.zeros((HP,), jnp.float32)
    Wih = jnp.zeros((HP, 3 * HP), jnp.float32)
    Whh = jnp.zeros((HP, 3 * HP), jnp.float32)
    bih = jnp.zeros((3 * HP,), jnp.float32)
    bhh = jnp.zeros((3 * HP,), jnp.float32)
    W2 = jnp.zeros((HP, QP), jnp.float32)
    b2 = jnp.zeros((QP,), jnp.float32)
    for s in range(K):
        r0 = s * H
        W1 = W1.at[:, r0:r0 + H].set(raw["w1"][s])
        b1 = b1.at[r0:r0 + H].set(raw["b1"][s])
        for g in range(3):
            c0 = g * HP + s * H
            Wih = Wih.at[r0:r0 + H, c0:c0 + H].set(raw["wih"][s][:, g * H:(g + 1) * H])
            Whh = Whh.at[r0:r0 + H, c0:c0 + H].set(raw["whh"][s][:, g * H:(g + 1) * H])
            bih = bih.at[c0:c0 + H].set(raw["bih"][s][g * H:(g + 1) * H])
            bhh = bhh.at[c0:c0 + H].set(raw["bhh"][s][g * H:(g + 1) * H])
        W2 = W2.at[r0:r0 + H, s * A:(s + 1) * A].set(raw["w2"][s])
        b2 = b2.at[s * A:(s + 1) * A].set(raw["b2"][s])

    params = {
        "w1": W1.astype(jnp.bfloat16),                                       # (Din, HP)
        "wslab": jnp.concatenate([Wih, Whh, W2], axis=1).astype(jnp.bfloat16),  # (HP, 6*HP+QP)
        "bslab": jnp.concatenate([b1, bih, bhh, b2])[None, :],               # (1, 7*HP+QP) f32
    }
    return params, raw


# ----------------------------------------------------------------------------
# Pure-JAX reference of the original module semantics (for correctness check).
# ----------------------------------------------------------------------------
def reference_forward(obs_seq, z_seq, raw, centroids, *, n_agents, hidden_dim, n_actions):
    T, N, _ = obs_seq.shape
    K = centroids.shape[0]
    bs = N // n_agents
    H, A = hidden_dim, n_actions
    rnd = lambda w: w.astype(jnp.bfloat16).astype(jnp.float32)
    c_t = centroids.astype(jnp.float32).T
    c_norm = jnp.sum(centroids.astype(jnp.float32) ** 2, axis=-1)[None, :]
    hs = [jnp.zeros((N, H), jnp.float32) for _ in range(K)]
    q_out = []
    for t in range(T):
        obs = obs_seq[t].astype(jnp.bfloat16).astype(jnp.float32)
        z = z_seq[t].astype(jnp.float32)
        score = c_norm - 2.0 * (z @ c_t)            # same argmin as kmeans.predict
        chosen = jnp.argmin(score, axis=-1)         # (bs,)
        q_sel = jnp.zeros((bs, n_agents, A), jnp.float32)
        for s in range(K):
            x = jnp.maximum(obs @ rnd(raw["w1"][s]) + raw["b1"][s], 0.0)
            x = x.astype(jnp.bfloat16).astype(jnp.float32)
            hb = hs[s].astype(jnp.bfloat16).astype(jnp.float32)
            gi = x @ rnd(raw["wih"][s]) + raw["bih"][s]
            gh = hb @ rnd(raw["whh"][s]) + raw["bhh"][s]
            r = jax.nn.sigmoid(gi[:, :H] + gh[:, :H])
            u = jax.nn.sigmoid(gi[:, H:2 * H] + gh[:, H:2 * H])
            n = jnp.tanh(gi[:, 2 * H:] + r * gh[:, 2 * H:])
            h_new = (1.0 - u) * n + u * hs[s]
            q = h_new.astype(jnp.bfloat16).astype(jnp.float32) @ rnd(raw["w2"][s]) + raw["b2"][s]
            hs[s] = h_new
            q_sel = jnp.where((chosen == s)[:, None, None], q.reshape(bs, n_agents, A), q_sel)
        q_out.append(q_sel.reshape(N, A))
    return jnp.stack(q_out, axis=0), hs


if __name__ == "__main__":
    # TODO(synk): sklearn KMeans *fitting* (set_dataset) and save/load_models
    # have no kernel equivalent; only kmeans.predict (nearest centroid) is
    # implemented, with precomputed centroids.
    n_sub_modules = 3
    n_agents = 2
    bs = 4
    input_dim = 16           # input_shape
    rnn_hidden_dim = 32
    n_actions = 8
    z_dim = 16
    T = 4                    # fused environment steps per pallas_call
    N = bs * n_agents

    key = jax.random.PRNGKey(0)
    k_obs, k_z, k_cent, k_par = jax.random.split(key, 4)
    obs_seq = jax.random.normal(k_obs, (T, N, input_dim), jnp.float32)
    z_seq = jax.random.normal(k_z, (T, bs, z_dim), jnp.float32)
    centroids = jax.random.normal(k_cent, (n_sub_modules, z_dim), jnp.float32)
    params, raw = make_params(k_par, n_sub_modules, input_dim, rnn_hidden_dim, n_actions)
    km_consts = prepare_kmeans(centroids)
    h0 = init_hidden(bs, n_agents, n_sub_modules, rnn_hidden_dim)

    # ---- fused T-step forward ----------------------------------------------
    out, h_T = kmeans_rnn_agent_forward(obs_seq, z_seq, h0, params, km_consts,
                                        n_agents=n_agents, n_actions=n_actions,
                                        hidden_dim=rnn_hidden_dim)
    jax.block_until_ready(out["q"])
    jax.block_until_ready(h_T)
    assert out["q"].shape == (T, N, n_actions)
    assert h_T.shape == h0.shape

    # ---- correctness vs pure-JAX reference of the module semantics ---------
    q_ref, h_ref_list = reference_forward(obs_seq, z_seq, raw, centroids,
                                          n_agents=n_agents, hidden_dim=rnn_hidden_dim,
                                          n_actions=n_actions)
    err_q = float(jnp.max(jnp.abs(out["q"] - q_ref)))
    h_split = split_hidden(h_T, n_sub_modules, rnn_hidden_dim)
    err_h = max(float(jnp.max(jnp.abs(h_split[s] - h_ref_list[s])))
                for s in range(n_sub_modules))
    assert err_q < 3e-2 and err_h < 3e-2, (err_q, err_h)

    # ---- original per-step API (T == 1) -------------------------------------
    out1, h1 = kmeans_rnn_agent_step(obs_seq[0], z_seq[0], h0, params, km_consts,
                                     n_agents=n_agents, n_actions=n_actions,
                                     hidden_dim=rnn_hidden_dim)
    jax.block_until_ready(out1["q"])
    assert out1["q"].shape == (N, n_actions)
    assert len(split_hidden(h1, n_sub_modules, rnn_hidden_dim)) == n_sub_modules
    assert all(h.shape == (N, rnn_hidden_dim)
               for h in split_hidden(h1, n_sub_modules, rnn_hidden_dim))
    assert bool(jnp.all(jnp.isfinite(out["q"])))
    assert bool(jnp.all(jnp.isfinite(out1["q"])))

    print("KERNEL_OK")
</pallas_src>

<mosaic_0001>
module attributes {stable_mosaic.version = 11 : i64} {
  func.func @_fused_kernel(%arg0: i32, %arg1: memref<1x4x16xf32, #tpu.memory_space<vmem>>, %arg2: memref<16x3xf32, #tpu.memory_space<vmem>>, %arg3: memref<1x3xf32, #tpu.memory_space<vmem>>, %arg4: memref<1x8x16xbf16, #tpu.memory_space<vmem>>, %arg5: memref<8x128xf32, #tpu.memory_space<vmem>>, %arg6: memref<16x128xbf16, #tpu.memory_space<vmem>>, %arg7: memref<128x896xbf16, #tpu.memory_space<vmem>>, %arg8: memref<1x1024xf32, #tpu.memory_space<vmem>>, %arg9: memref<1x8x128xf32, #tpu.memory_space<vmem>>, %arg10: memref<8x128xf32, #tpu.memory_space<vmem>>) attributes {dimension_semantics = [#tpu.dimension_semantics<arbitrary>], iteration_bounds = array<i64: 4>, scalar_prefetch = 0 : i64, scratch_operands = 0 : i64, tpu.core_type = #tpu.core_type<tc>, window_params = [{transform_indices = @transform_0, window_bounds = array<i64: 1, 4, 16>}, {pipeline_mode = #tpu.pipeline_mode<synchronous>, transform_indices = @transform_1, window_bounds = array<i64: 16, 3>}, {pipeline_mode = #tpu.pipeline_mode<synchronous>, transform_indices = @transform_2, window_bounds = array<i64: 1, 3>}, {transform_indices = @transform_3, window_bounds = array<i64: 1, 8, 16>}, {pipeline_mode = #tpu.pipeline_mode<synchronous>, transform_indices = @transform_4, window_bounds = array<i64: 8, 128>}, {pipeline_mode = #tpu.pipeline_mode<synchronous>, transform_indices = @transform_5, window_bounds = array<i64: 16, 128>}, {pipeline_mode = #tpu.pipeline_mode<synchronous>, transform_indices = @transform_6, window_bounds = array<i64: 128, 896>}, {pipeline_mode = #tpu.pipeline_mode<synchronous>, transform_indices = @transform_7, window_bounds = array<i64: 1, 1024>}, {transform_indices = @transform_8, window_bounds = array<i64: 1, 8, 128>}, {pipeline_mode = #tpu.pipeline_mode<synchronous>, transform_indices = @transform_9, window_bounds = array<i64: 8, 128>}]} {
    %c0_i32 = arith.constant 0 : i32
    %0 = arith.cmpi eq, %arg0, %c0_i32 : i32
    %1 = arith.extui %0 : i1 to i32
    %c0_i32_0 = arith.constant 0 : i32
    %2 = arith.cmpi ne, %1, %c0_i32_0 : i32
    scf.if %2 {
      %c0_41 = arith.constant 0 : index
      %c0_42 = arith.constant 0 : index
      %106 = vector.load %arg5[%c0_41, %c0_42] : memref<8x128xf32, #tpu.memory_space<vmem>>, vector<8x128xf32>
      %c0_43 = arith.constant 0 : index
      %c0_44 = arith.constant 0 : index
      %107 = vector.load %arg10[%c0_43, %c0_44] : memref<8x128xf32, #tpu.memory_space<vmem>>, vector<8x128xf32>
      tpu.vector_store %arg10[%c0_43, %c0_44], %106 {strides = array<i32>} : memref<8x128xf32, #tpu.memory_space<vmem>>, vector<8x128xf32>,
    } else {
    }
    %c0 = arith.constant 0 : index
    %c0_1 = arith.constant 0 : index
    %c0_2 = arith.constant 0 : index
    %3 = vector.load %arg1[%c0, %c0_1, %c0_2] : memref<1x4x16xf32, #tpu.memory_space<vmem>>, vector<1x4x16xf32>
    %4 = vector.shape_cast %3 : vector<1x4x16xf32> to vector<4x16xf32>
    %c0_3 = arith.constant 0 : index
    %c0_4 = arith.constant 0 : index
    %5 = vector.load %arg3[%c0_3, %c0_4] : memref<1x3xf32, #tpu.memory_space<vmem>>, vector<1x3xf32>
    %c0_5 = arith.constant 0 : index
    %c0_6 = arith.constant 0 : index
    %6 = vector.load %arg2[%c0_5, %c0_6] : memref<16x3xf32, #tpu.memory_space<vmem>>, vector<16x3xf32>
    %cst = arith.constant dense<0.000000e+00> : vector<4x3xf32>
    %7 = tpu.matmul %4, %6, %cst {dimension_numbers = #tpu.dot_dimension_numbers<[1], [0], [0], [1], [0, 0, 1, 1], [], []>} : vector<4x16xf32>, vector<16x3xf32>, vector<4x3xf32> -> vector<4x3xf32>
    %cst_7 = arith.constant 2.000000e+00 : f32
    %8 = vector.broadcast %cst_7 : f32 to vector<4x3xf32>
    %9 = arith.mulf %8, %7 : vector<4x3xf32>
    %10 = vector.broadcast %5 : vector<1x3xf32> to vector<4x3xf32>
    %11 = arith.subf %10, %9 : vector<4x3xf32>
    %cst_8 = arith.constant dense<0x7F800000> : vector<4xf32>
    %12 = vector.multi_reduction <minimumf>, %11, %cst_8 [1] : vector<4x3xf32> to vector<4xf32>
    %13 = vector.shape_cast %12 : vector<4xf32> to vector<4x1xf32>
    %14 = tpu.iota {dimensions = array<i32: 1>} : vector<4x3xi32>
    %15 = vector.broadcast %13 : vector<4x1xf32> to vector<4x3xf32>
    %16 = arith.cmpf ole, %11, %15 : vector<4x3xf32>
    %c3_i32 = arith.constant 3 : i32
    %17 = vector.broadcast %c3_i32 : i32 to vector<4x3xi32>
    %18 = arith.select %16, %14, %17 : vector<4x3xi1>, vector<4x3xi32>
    %cst_9 = arith.constant dense<2147483647> : vector<4xi32>
    %19 = vector.multi_reduction <minsi>, %18, %cst_9 [1] : vector<4x3xi32> to vector<4xi32>
    %20 = vector.shape_cast %19 : vector<4xi32> to vector<4x1xi32>
    %21 = tpu.iota {dimensions = array<i32: 1>} : vector<4x128xi32>
    %c8_i32 = arith.constant 8 : i32
    %22 = vector.broadcast %c8_i32 : i32 to vector<4x1xi32>
    %23 = arith.muli %20, %22 : vector<4x1xi32>
    %24 = vector.broadcast %23 : vector<4x1xi32> to vector<4x128xi32>
    %25 = arith.cmpi sge, %21, %24 : vector<4x128xi32>
    %c8_i32_10 = arith.constant 8 : i32
    %26 = vector.broadcast %c8_i32_10 : i32 to vector<4x1xi32>
    %27 = arith.addi %23, %26 : vector<4x1xi32>
    %28 = vector.broadcast %27 : vector<4x1xi32> to vector<4x128xi32>
    %29 = arith.cmpi slt, %21, %28 : vector<4x128xi32>
    %30 = arith.andi %25, %29 : vector<4x128xi1>
    %31 = arith.extui %30 : vector<4x128xi1> to vector<4x128xi32>
    %32 = arith.sitofp %31 : vector<4x128xi32> to vector<4x128xf32>
    %33 = tpu.iota {dimensions = array<i32: 0>} : vector<8x4xi32>
    %34 = tpu.iota {dimensions = array<i32: 1>} : vector<8x4xi32>
    %c2_i32 = arith.constant 2 : i32
    %35 = vector.broadcast %c2_i32 : i32 to vector<8x4xi32>
    %36 = arith.muli %34, %35 : vector<8x4xi32>
    %37 = arith.cmpi sge, %33, %36 : vector<8x4xi32>
    %c1_i32 = arith.constant 1 : i32
    %38 = vector.broadcast %c1_i32 : i32 to vector<8x4xi32>
    %39 = arith.addi %34, %38 : vector<8x4xi32>
    %c2_i32_11 = arith.constant 2 : i32
    %40 = vector.broadcast %c2_i32_11 : i32 to vector<8x4xi32>
    %41 = arith.muli %39, %40 : vector<8x4xi32>
    %42 = arith.cmpi slt, %33, %41 : vector<8x4xi32>
    %43 = arith.andi %37, %42 : vector<8x4xi1>
    %44 = arith.extui %43 : vector<8x4xi1> to vector<8x4xi32>
    %45 = arith.sitofp %44 : vector<8x4xi32> to vector<8x4xf32>
    %cst_12 = arith.constant dense<0.000000e+00> : vector<8x128xf32>
    %46 = tpu.matmul %45, %32, %cst_12 {dimension_numbers = #tpu.dot_dimension_numbers<[1], [0], [0], [1], [0, 0, 1, 1], [], []>} : vector<8x4xf32>, vector<4x128xf32>, vector<8x128xf32> -> vector<8x128xf32>
    %c0_13 = arith.constant 0 : index
    %c0_14 = arith.constant 0 : index
    %c0_15 = arith.constant 0 : index
    %47 = vector.load %arg4[%c0_13, %c0_14, %c0_15] : memref<1x8x16xbf16, #tpu.memory_space<vmem>>, vector<1x8x16xbf16>
    %48 = vector.shape_cast %47 : vector<1x8x16xbf16> to vector<8x16xbf16>
    %c0_16 = arith.constant 0 : index
    %c0_17 = arith.constant 0 : index
    %49 = vector.load %arg10[%c0_16, %c0_17] : memref<8x128xf32, #tpu.memory_space<vmem>>, vector<8x128xf32>
    %50 = arith.truncf %49 : vector<8x128xf32> to vector<8x128xbf16>
    %c0_18 = arith.constant 0 : index
    %c0_19 = arith.constant 0 : index
    %51 = vector.load %arg8[%c0_18, %c0_19] : memref<1x1024xf32, #tpu.memory_space<vmem>>, vector<1x128xf32>
    %c0_20 = arith.constant 0 : index
    %c128 = arith.constant 128 : index
    %52 = vector.load %arg8[%c0_20, %c128] : memref<1x1024xf32, #tpu.memory_space<vmem>>, vector<1x384xf32>
    %c0_21 = arith.constant 0 : index
    %c512 = arith.constant 512 : index
    %53 = vector.load %arg8[%c0_21, %c512] : memref<1x1024xf32, #tpu.memory_space<vmem>>, vector<1x384xf32>
    %c0_22 = arith.constant 0 : index
    %c896 = arith.constant 896 : index
    %54 = vector.load %arg8[%c0_22, %c896] : memref<1x1024xf32, #tpu.memory_space<vmem>>, vector<1x128xf32>
    %c0_23 = arith.constant 0 : index
    %c0_24 = arith.constant 0 : index
    %55 = vector.load %arg6[%c0_23, %c0_24] : memref<16x128xbf16, #tpu.memory_space<vmem>>, vector<16x128xbf16>
    %cst_25 = arith.constant dense<0.000000e+00> : vector<8x128xf32>
    %56 = tpu.matmul %48, %55, %cst_25 {dimension_numbers = #tpu.dot_dimension_numbers<[1], [0], [0], [1], [0, 0, 1, 1], [], []>} : vector<8x16xbf16>, vector<16x128xbf16>, vector<8x128xf32> -> vector<8x128xf32>
    %57 = vector.broadcast %51 : vector<1x128xf32> to vector<8x128xf32>
    %58 = arith.addf %56, %57 : vector<8x128xf32>
    %cst_26 = arith.constant 0.000000e+00 : f32
    %59 = vector.broadcast %cst_26 : f32 to vector<8x128xf32>
    %60 = arith.maximumf %58, %59 : vector<8x128xf32>
    %61 = arith.truncf %60 : vector<8x128xf32> to vector<8x128xbf16>
    %c0_27 = arith.constant 0 : index
    %c0_28 = arith.constant 0 : index
    %62 = vector.load %arg7[%c0_27, %c0_28] : memref<128x896xbf16, #tpu.memory_space<vmem>>, vector<128x384xbf16>
    %cst_29 = arith.constant dense<0.000000e+00> : vector<8x384xf32>
    %63 = tpu.matmul %61, %62, %cst_29 {dimension_numbers = #tpu.dot_dimension_numbers<[1], [0], [0], [1], [0, 0, 1, 1], [], []>} : vector<8x128xbf16>, vector<128x384xbf16>, vector<8x384xf32> -> vector<8x384xf32>
    %64 = vector.broadcast %52 : vector<1x384xf32> to vector<8x384xf32>
    %65 = arith.addf %63, %64 : vector<8x384xf32>
    %c0_30 = arith.constant 0 : index
    %c384 = arith.constant 384 : index
    %66 = vector.load %arg7[%c0_30, %c384] : memref<128x896xbf16, #tpu.memory_space<vmem>>, vector<128x384xbf16>
    %cst_31 = arith.constant dense<0.000000e+00> : vector<8x384xf32>
    %67 = tpu.matmul %50, %66, %cst_31 {dimension_numbers = #tpu.dot_dimension_numbers<[1], [0], [0], [1], [0, 0, 1, 1], [], []>} : vector<8x128xbf16>, vector<128x384xbf16>, vector<8x384xf32> -> vector<8x384xf32>
    %68 = vector.broadcast %53 : vector<1x384xf32> to vector<8x384xf32>
    %69 = arith.addf %67, %68 : vector<8x384xf32>
    %70 = vector.extract_strided_slice %65 {offsets = [0, 0], sizes = [8, 256], strides = [1, 1]} : vector<8x384xf32> to vector<8x256xf32>
    %71 = vector.extract_strided_slice %69 {offsets = [0, 0], sizes = [8, 256], strides = [1, 1]} : vector<8x384xf32> to vector<8x256xf32>
    %72 = arith.addf %70, %71 : vector<8x256xf32>
    %73 = arith.negf %72 : vector<8x256xf32>
    %74 = math.exp %73 : vector<8x256xf32>
    %cst_32 = arith.constant 1.000000e+00 : f32
    %75 = vector.broadcast %cst_32 : f32 to vector<8x256xf32>
    %76 = arith.addf %75, %74 : vector<8x256xf32>
    %77 = arith.divf %75, %76 : vector<8x256xf32>
    %78 = vector.extract_strided_slice %77 {offsets = [0, 0], sizes = [8, 128], strides = [1, 1]} : vector<8x256xf32> to vector<8x128xf32>
    %79 = vector.extract_strided_slice %77 {offsets = [0, 128], sizes = [8, 128], strides = [1, 1]} : vector<8x256xf32> to vector<8x128xf32>
    %80 = vector.extract_strided_slice %65 {offsets = [0, 256], sizes = [8, 128], strides = [1, 1]} : vector<8x384xf32> to vector<8x128xf32>
    %81 = vector.extract_strided_slice %69 {offsets = [0, 256], sizes = [8, 128], strides = [1, 1]} : vector<8x384xf32> to vector<8x128xf32>
    %82 = arith.mulf %78, %81 : vector<8x128xf32>
    %83 = arith.addf %80, %82 : vector<8x128xf32>
    %84 = math.tanh %83 : vector<8x128xf32>
    %cst_33 = arith.constant 1.000000e+00 : f32
    %85 = vector.broadcast %cst_33 : f32 to vector<8x128xf32>
    %86 = arith.subf %85, %79 : vector<8x128xf32>
    %87 = arith.mulf %86, %84 : vector<8x128xf32>
    %88 = arith.mulf %79, %49 : vector<8x128xf32>
    %89 = arith.addf %87, %88 : vector<8x128xf32>
    %90 = tpu.iota {dimensions = array<i32: 1>} : vector<8x128xi32>
    %c96_i32 = arith.constant 96 : i32
    %91 = vector.broadcast %c96_i32 : i32 to vector<8x128xi32>
    %92 = arith.cmpi slt, %90, %91 : vector<8x128xi32>
    %93 = arith.extui %92 : vector<8x128xi1> to vector<8x128xi32>
    %94 = arith.sitofp %93 : vector<8x128xi32> to vector<8x128xf32>
    %95 = arith.mulf %89, %94 : vector<8x128xf32>
    %c0_34 = arith.constant 0 : index
    %c0_35 = arith.constant 0 : index
    %96 = vector.load %arg10[%c0_34, %c0_35] : memref<8x128xf32, #tpu.memory_space<vmem>>, vector<8x128xf32>
    tpu.vector_store %arg10[%c0_34, %c0_35], %95 {strides = array<i32>} : memref<8x128xf32, #tpu.memory_space<vmem>>, vector<8x128xf32>,
    %97 = arith.truncf %95 : vector<8x128xf32> to vector<8x128xbf16>
    %c0_36 = arith.constant 0 : index
    %c768 = arith.constant 768 : index
    %98 = vector.load %arg7[%c0_36, %c768] : memref<128x896xbf16, #tpu.memory_space<vmem>>, vector<128x128xbf16>
    %cst_37 = arith.constant dense<0.000000e+00> : vector<8x128xf32>
    %99 = tpu.matmul %97, %98, %cst_37 {dimension_numbers = #tpu.dot_dimension_numbers<[1], [0], [0], [1], [0, 0, 1, 1], [], []>} : vector<8x128xbf16>, vector<128x128xbf16>, vector<8x128xf32> -> vector<8x128xf32>
    %100 = vector.broadcast %54 : vector<1x128xf32> to vector<8x128xf32>
    %101 = arith.addf %99, %100 : vector<8x128xf32>
    %102 = arith.mulf %101, %46 : vector<8x128xf32>
    %c0_38 = arith.constant 0 : index
    %c0_39 = arith.constant 0 : index
    %c0_40 = arith.constant 0 : index
    %103 = vector.load %arg9[%c0_38, %c0_39, %c0_40] : memref<1x8x128xf32, #tpu.memory_space<vmem>>, vector<1x8x128xf32>
    %104 = vector.shape_cast %103 : vector<1x8x128xf32> to vector<8x128xf32>
    %105 = vector.shape_cast %102 : vector<8x128xf32> to vector<1x8x128xf32>
    tpu.vector_store %arg9[%c0_38, %c0_39, %c0_40], %105 {strides = array<i32>} : memref<1x8x128xf32, #tpu.memory_space<vmem>>, vector<1x8x128xf32>,
    return
  }
  func.func @transform_0(%arg0: i32) -> (i32, i32, i32) {
    %c0_i32 = arith.constant 0 : i32
    %c0_i32_0 = arith.constant 0 : i32
    %c0_i32_1 = arith.constant 0 : i32
    return %arg0, %c0_i32, %c0_i32_0 : i32, i32, i32
  }
  func.func @transform_1(%arg0: i32) -> (i32, i32) {
    %c0_i32 = arith.constant 0 : i32
    %c0_i32_0 = arith.constant 0 : i32
    %c0_i32_1 = arith.constant 0 : i32
    return %c0_i32, %c0_i32_0 : i32, i32
  }
  func.func @transform_2(%arg0: i32) -> (i32, i32) {
    %c0_i32 = arith.constant 0 : i32
    %c0_i32_0 = arith.constant 0 : i32
    %c0_i32_1 = arith.constant 0 : i32
    return %c0_i32, %c0_i32_0 : i32, i32
  }
  func.func @transform_3(%arg0: i32) -> (i32, i32, i32) {
    %c0_i32 = arith.constant 0 : i32
    %c0_i32_0 = arith.constant 0 : i32
    %c0_i32_1 = arith.constant 0 : i32
    return %arg0, %c0_i32, %c0_i32_0 : i32, i32, i32
  }
  func.func @transform_4(%arg0: i32) -> (i32, i32) {
    %c0_i32 = arith.constant 0 : i32
    %c0_i32_0 = arith.constant 0 : i32
    %c0_i32_1 = arith.constant 0 : i32
    return %c0_i32, %c0_i32_0 : i32, i32
  }
  func.func @transform_5(%arg0: i32) -> (i32, i32) {
    %c0_i32 = arith.constant 0 : i32
    %c0_i32_0 = arith.constant 0 : i32
    %c0_i32_1 = arith.constant 0 : i32
    return %c0_i32, %c0_i32_0 : i32, i32
  }
  func.func @transform_6(%arg0: i32) -> (i32, i32) {
    %c0_i32 = arith.constant 0 : i32
    %c0_i32_0 = arith.constant 0 : i32
    %c0_i32_1 = arith.constant 0 : i32
    return %c0_i32, %c0_i32_0 : i32, i32
  }
  func.func @transform_7(%arg0: i32) -> (i32, i32) {
    %c0_i32 = arith.constant 0 : i32
    %c0_i32_0 = arith.constant 0 : i32
    %c0_i32_1 = arith.constant 0 : i32
    return %c0_i32, %c0_i32_0 : i32, i32
  }
  func.func @transform_8(%arg0: i32) -> (i32, i32, i32) {
    %c0_i32 = arith.constant 0 : i32
    %c0_i32_0 = arith.constant 0 : i32
    %c0_i32_1 = arith.constant 0 : i32
    return %arg0, %c0_i32, %c0_i32_0 : i32, i32, i32
  }
  func.func @transform_9(%arg0: i32) -> (i32, i32) {
    %c0_i32 = arith.constant 0 : i32
    %c0_i32_0 = arith.constant 0 : i32
    %c0_i32_1 = arith.constant 0 : i32
    return %c0_i32, %c0_i32_0 : i32, i32
  }
}

</mosaic_0001>

<llo_original>
// kernel: kmeans_rnn_agent_forward.1
$region0: #{kmeans_rnn_agent_forward.1}
  #allocation0 [shape = 'u32[]', space=smem, size = 0x4, offset = 0x4, fixed_abs, tag = 'smem constant byte address 0x4 - core index']
  #allocation1 [shape = 'u32[144,128]{1,0:T(1,128)}', space=vmem, size = 0x12000, scoped, tag = 'internal scratch']
  %s0 = inlined_call_operand.vmem [shape: f32[4,4,16], index: 0, kind: input, shape index: {}]
  %s1 = inlined_call_operand.vmem [shape: f32[16,3], index: 1, kind: input, shape index: {}]
  %s2 = inlined_call_operand.vmem [shape: f32[1,3], index: 2, kind: input, shape index: {}]
  %s3 = inlined_call_operand.vmem [shape: bf16[4,8,16], index: 3, kind: input, shape index: {}]
  %s4 = inlined_call_operand.vmem [shape: f32[8,128], index: 4, kind: input, shape index: {}, may-alias: {4,9}]
  %s5 = inlined_call_operand.vmem [shape: bf16[16,128], index: 5, kind: input, shape index: {}]
  %s6 = inlined_call_operand.hbm [shape: bf16[128,896], index: 6, kind: input, shape index: {}]
  %s7 = inlined_call_operand.vmem [shape: f32[1,1024], index: 7, kind: input, shape index: {}]
  %s8 = inlined_call_operand.vmem [shape: f32[4,8,128], index: 8, kind: output, shape index: {0}]
  %s9 = inlined_call_operand.vmem [shape: f32[8,128], index: 9, kind: output, shape index: {1}, may-alias: {4,9}]
  %10 = xla_tuple %s8, %s9
  %s11 = sld [smem:[#allocation0]]
  $region81: #{kmeans_rnn_agent_forward.1} parent=0
    _
  %s13 = ssub.s32 1, %s11
  %s14 = scalar_select 0, %s13, %s11
  $region1: #{kmeans_rnn_agent_forward.1} parent=0
    #allocation2 [shape = 'u8[229376]{0}', space=vmem, size = 0x38000, scoped, tag = 'input window, operand 6, single buffered']
    #allocation3 [shape = 's32[2]{0}', space=sflag, size = 0x8, scoped, tag = 'scoped memory for kmeans_rnn_agent_forward.1']
    %15 = vsyncpa [#allocation3], 0
    loop: start=0, step=1, limit=6
    $region2: #{kmeans_rnn_agent_forward.1} parent=1 // loop_pre_header
      _
    $region3: #{kmeans_rnn_agent_forward.1} parent=1 // loop_header
      %s17 = sphi 0, %s21
      %p18 = scmp.ge.s32.totalorder %s17, 6
      %s27 = sphi 0, %s29
      %s30 = sphi 0, %s27
      %s31 = sphi 0, %s30
      %s47 = sphi 0, %s31
      %s51 = sphi 0, %s51
      %s53 = sphi 0, %s51
      %s54 = sphi 0, %s53
      %s68 = sphi 0, %s54
      %s72 = sphi 0, %s72
      %s74 = sphi 0, %s72
      %s75 = sphi 0, %s74
      %s89 = sphi 0, %s75
      %s95 = sphi 0, %s97
      %s98 = sphi 0, %s95
      %s99 = sphi 0, %s98
      %s115 = sphi 0, %s99
      %s119 = sphi 0, %s119
      %s121 = sphi 0, %s119
      %s122 = sphi 0, %s121
      %s136 = sphi 0, %s122
      %s140 = sphi 0, %s140
      %s142 = sphi 0, %s140
      %s143 = sphi 0, %s142
      %s157 = sphi 0, %s143
      %s161 = sphi 0, %s161
      %s163 = sphi 0, %s161
      %s164 = sphi 0, %s163
      %s178 = sphi 0, %s164
      %s182 = sphi 0, %s182
      %s184 = sphi 0, %s182
      %s185 = sphi 0, %s184
      %s199 = sphi 0, %s185
      %s205 = sphi 0, %s207
      %s208 = sphi 0, %s205
      %s209 = sphi 0, %s208
      %s225 = sphi 0, %s209
      %s229 = sphi 0, %s229
      %s231 = sphi 0, %s229
      %s232 = sphi 0, %s231
      %s246 = sphi 0, %s232
    $region4: #{kmeans_rnn_agent_forward.1} parent=1 // loop_header_branch
      %20 = sbr.rel (%p18) target = $region8
    $region5: #{kmeans_rnn_agent_forward.1} parent=1 // loop_body
      %s22 = ssub.s32 %s17, 1
      %s23 = ssub.s32 %s17, 2
      %s24 = sadd.s32 %s17, 1
      %s25 = ssub.s32 %s17, %s24
      %p26 = scmp.eq.s32.totalorder %s25, 0
      %s28 = sadd.s32 %s27, 1
      %s29 = scalar_select %p26, %s27, %s28
      %p32 = pneg %p26
      %p33 = scmp.eq.s32.totalorder %s17, 3
      %p34 = por %p32, %p33
      %p35 = scmp.ne.s32.totalorder %s27, %s30
      %p36 = scmp.eq.s32.totalorder %s17, 0
      %p37 = por %p35, %p36
      %p38 = scmp.ne.s32.totalorder %s27, %s30
      %p39 = scmp.eq.s32.totalorder %s22, 3
      %p40 = por %p38, %p39
      %p41 = scmp.ne.s32.totalorder %s30, %s31
      %p42 = scmp.eq.s32.totalorder %s22, 0
      %p43 = por %p41, %p42
      %p44 = scmp.ne.s32.totalorder %s30, %s31
      %p45 = scmp.eq.s32.totalorder %s23, 3
      %p46 = por %p44, %p45
      %p48 = scmp.ne.s32.totalorder %s31, %s47
      %p49 = scmp.eq.s32.totalorder %s23, 0
      %p50 = por %p48, %p49
      %s52 = sadd.s32 %s51, 1
      %p55 = scmp.eq.s32.totalorder %s17, 3
      %p56 = scmp.ne.s32.totalorder %s51, %s53
      %p57 = scmp.eq.s32.totalorder %s17, 0
      %p58 = por %p56, %p57
      %p59 = scmp.ne.s32.totalorder %s51, %s53
      %p60 = scmp.eq.s32.totalorder %s22, 3
      %p61 = por %p59, %p60
      %p62 = scmp.ne.s32.totalorder %s53, %s54
      %p63 = scmp.eq.s32.totalorder %s22, 0
      %p64 = por %p62, %p63
      %p65 = scmp.ne.s32.totalorder %s53, %s54
      %p66 = scmp.eq.s32.totalorder %s23, 3
      %p67 = por %p65, %p66
      %p69 = scmp.ne.s32.totalorder %s54, %s68
      %p70 = scmp.eq.s32.totalorder %s23, 0
      %p71 = por %p69, %p70
      %s73 = sadd.s32 %s72, 1
      %p76 = scmp.eq.s32.totalorder %s17, 3
      %p77 = scmp.ne.s32.totalorder %s72, %s74
      %p78 = scmp.eq.s32.totalorder %s17, 0
      %p79 = por %p77, %p78
      %p80 = scmp.ne.s32.totalorder %s72, %s74
      %p81 = scmp.eq.s32.totalorder %s22, 3
      %p82 = por %p80, %p81
      %p83 = scmp.ne.s32.totalorder %s74, %s75
      %p84 = scmp.eq.s32.totalorder %s22, 0
      %p85 = por %p83, %p84
      %p86 = scmp.ne.s32.totalorder %s74, %s75
      %p87 = scmp.eq.s32.totalorder %s23, 3
      %p88 = por %p86, %p87
      %p90 = scmp.ne.s32.totalorder %s75, %s89
      %p91 = scmp.eq.s32.totalorder %s23, 0
      %p92 = por %p90, %p91
      %s93 = ssub.s32 %s17, %s24
      %p94 = scmp.eq.s32.totalorder %s93, 0
      %s96 = sadd.s32 %s95, 1
      %s97 = scalar_select %p94, %s95, %s96
      %p100 = pneg %p94
      %p101 = scmp.eq.s32.totalorder %s17, 3
      %p102 = por %p100, %p101
      %p103 = scmp.ne.s32.totalorder %s95, %s98
      %p104 = scmp.eq.s32.totalorder %s17, 0
      %p105 = por %p103, %p104
      %p106 = scmp.ne.s32.totalorder %s95, %s98
      %p107 = scmp.eq.s32.totalorder %s22, 3
      %p108 = por %p106, %p107
      %p109 = scmp.ne.s32.totalorder %s98, %s99
      %p110 = scmp.eq.s32.totalorder %s22, 0
      %p111 = por %p109, %p110
      %p112 = scmp.ne.s32.totalorder %s98, %s99
      %p113 = scmp.eq.s32.totalorder %s23, 3
      %p114 = por %p112, %p113
      %p116 = scmp.ne.s32.totalorder %s99, %s115
      %p117 = scmp.eq.s32.totalorder %s23, 0
      %p118 = por %p116, %p117
      %s120 = sadd.s32 %s119, 1
      %p123 = scmp.eq.s32.totalorder %s17, 3
      %p124 = scmp.ne.s32.totalorder %s119, %s121
      %p125 = scmp.eq.s32.totalorder %s17, 0
      %p126 = por %p124, %p125
      %p127 = scmp.ne.s32.totalorder %s119, %s121
      %p128 = scmp.eq.s32.totalorder %s22, 3
      %p129 = por %p127, %p128
      %p130 = scmp.ne.s32.totalorder %s121, %s122
      %p131 = scmp.eq.s32.totalorder %s22, 0
      %p132 = por %p130, %p131
      %p133 = scmp.ne.s32.totalorder %s121, %s122
      %p134 = scmp.eq.s32.totalorder %s23, 3
      %p135 = por %p133, %p134
      %p137 = scmp.ne.s32.totalorder %s122, %s136
      %p138 = scmp.eq.s32.totalorder %s23, 0
      %p139 = por %p137, %p138
      %s141 = sadd.s32 %s140, 1
      %p144 = scmp.eq.s32.totalorder %s17, 3
      %p145 = scmp.ne.s32.totalorder %s140, %s142
      %p146 = scmp.eq.s32.totalorder %s17, 0
      %p147 = por %p145, %p146
      %p148 = scmp.ne.s32.totalorder %s140, %s142
      %p149 = scmp.eq.s32.totalorder %s22, 3
      %p150 = por %p148, %p149
      %p151 = scmp.ne.s32.totalorder %s142, %s143
      %p152 = scmp.eq.s32.totalorder %s22, 0
      %p153 = por %p151, %p152
      %p154 = scmp.ne.s32.totalorder %s142, %s143
      %p155 = scmp.eq.s32.totalorder %s23, 3
      %p156 = por %p154, %p155
      %p158 = scmp.ne.s32.totalorder %s143, %s157
      %p159 = scmp.eq.s32.totalorder %s23, 0
      %p160 = por %p158, %p159
      %s162 = sadd.s32 %s161, 1
      %p165 = scmp.eq.s32.totalorder %s17, 3
      %p166 = scmp.ne.s32.totalorder %s161, %s163
      %p167 = scmp.eq.s32.totalorder %s17, 0
      %p168 = por %p166, %p167
      %p169 = scmp.ne.s32.totalorder %s161, %s163
      %p170 = scmp.eq.s32.totalorder %s22, 3
      %p171 = por %p169, %p170
      %p172 = scmp.ne.s32.totalorder %s163, %s164
      %p173 = scmp.eq.s32.totalorder %s22, 0
      %p174 = por %p172, %p173
      %p175 = scmp.ne.s32.totalorder %s163, %s164
      %p176 = scmp.eq.s32.totalorder %s23, 3
      %p177 = por %p175, %p176
      %p179 = scmp.ne.s32.totalorder %s164, %s178
      %p180 = scmp.eq.s32.totalorder %s23, 0
      %p181 = por %p179, %p180
      %s183 = sadd.s32 %s182, 1
      %p186 = scmp.eq.s32.totalorder %s17, 3
      %p187 = scmp.ne.s32.totalorder %s182, %s184
      %p188 = scmp.eq.s32.totalorder %s17, 0
      %p189 = por %p187, %p188
      %p190 = scmp.ne.s32.totalorder %s182, %s184
      %p191 = scmp.eq.s32.totalorder %s22, 3
      %p192 = por %p190, %p191
      %p193 = scmp.ne.s32.totalorder %s184, %s185
      %p194 = scmp.eq.s32.totalorder %s22, 0
      %p195 = por %p193, %p194
      %p196 = scmp.ne.s32.totalorder %s184, %s185
      %p197 = scmp.eq.s32.totalorder %s23, 3
      %p198 = por %p196, %p197
      %p200 = scmp.ne.s32.totalorder %s185, %s199
      %p201 = scmp.eq.s32.totalorder %s23, 0
      %p202 = por %p200, %p201
      %s203 = ssub.s32 %s17, %s24
      %p204 = scmp.eq.s32.totalorder %s203, 0
      %s206 = sadd.s32 %s205, 1
      %s207 = scalar_select %p204, %s205, %s206
      %p210 = pneg %p204
      %p211 = scmp.eq.s32.totalorder %s17, 3
      %p212 = por %p210, %p211
      %p213 = scmp.ne.s32.totalorder %s205, %s208
      %p214 = scmp.eq.s32.totalorder %s17, 0
      %p215 = por %p213, %p214
      %p216 = scmp.ne.s32.totalorder %s205, %s208
      %p217 = scmp.eq.s32.totalorder %s22, 3
      %p218 = por %p216, %p217
      %p219 = scmp.ne.s32.totalorder %s208, %s209
      %p220 = scmp.eq.s32.totalorder %s22, 0
      %p221 = por %p219, %p220
      %p222 = scmp.ne.s32.totalorder %s208, %s209
      %p223 = scmp.eq.s32.totalorder %s23, 3
      %p224 = por %p222, %p223
      %p226 = scmp.ne.s32.totalorder %s209, %s225
      %p227 = scmp.eq.s32.totalorder %s23, 0
      %p228 = por %p226, %p227
      %s230 = sadd.s32 %s229, 1
      %p233 = scmp.eq.s32.totalorder %s17, 3
      %p234 = scmp.ne.s32.totalorder %s229, %s231
      %p235 = scmp.eq.s32.totalorder %s17, 0
      %p236 = por %p234, %p235
      %p237 = scmp.ne.s32.totalorder %s229, %s231
      %p238 = scmp.eq.s32.totalorder %s22, 3
      %p239 = por %p237, %p238
      %p240 = scmp.ne.s32.totalorder %s231, %s232
      %p241 = scmp.eq.s32.totalorder %s22, 0
      %p242 = por %p240, %p241
      %p243 = scmp.ne.s32.totalorder %s231, %s232
      %p244 = scmp.eq.s32.totalorder %s23, 3
      %p245 = por %p243, %p244
      %p247 = scmp.ne.s32.totalorder %s232, %s246
      %p248 = scmp.eq.s32.totalorder %s23, 0
      %p249 = por %p247, %p248
      %p250 = scmp.le.s32.totalorder 1, %s17
      %p251 = scmp.lt.s32.totalorder %s17, 5
      %p252 = pnand %p250, %p251
      %p253 = pneg %p252
      // Predicated region
      $region9: #{kmeans_rnn_agent_forward.1} parent=5 // pred_check
        _
      $region10: #{kmeans_rnn_agent_forward.1} parent=5 // pred_check_branch
        %255 = sbr.rel (%p252) target = $region12
      $region11: #{kmeans_rnn_agent_forward.1} parent=5 // pred_region
        %s256 = ssub.s32 %s17, 1
        // Predicated region
        $region13: #{kmeans_rnn_agent_forward.1} parent=11 // pred_check
          %p257 = pneg %p64
        $region14: #{kmeans_rnn_agent_forward.1} parent=11 // pred_check_branch
          %259 = sbr.rel (%p257) target = $region16
        $region15: #{kmeans_rnn_agent_forward.1} parent=11 // pred_region
          _
        $region16: #{kmeans_rnn_agent_forward.1} parent=11 // pred_fallthru
          _
        // Predicated region
        $region17: #{kmeans_rnn_agent_forward.1} parent=11 // pred_check
          %p260 = pneg %p85
        $region18: #{kmeans_rnn_agent_forward.1} parent=11 // pred_check_branch
          %262 = sbr.rel (%p260) target = $region20
        $region19: #{kmeans_rnn_agent_forward.1} parent=11 // pred_region
          _
        $region20: #{kmeans_rnn_agent_forward.1} parent=11 // pred_fallthru
          _
        // Predicated region
        $region21: #{kmeans_rnn_agent_forward.1} parent=11 // pred_check
          %p263 = pneg %p132
        $region22: #{kmeans_rnn_agent_forward.1} parent=11 // pred_check_branch
          %265 = sbr.rel (%p263) target = $region24
        $region23: #{kmeans_rnn_agent_forward.1} parent=11 // pred_region
          _
        $region24: #{kmeans_rnn_agent_forward.1} parent=11 // pred_fallthru
          _
        // Predicated region
        $region25: #{kmeans_rnn_agent_forward.1} parent=11 // pred_check
          %p266 = pneg %p153
        $region26: #{kmeans_rnn_agent_forward.1} parent=11 // pred_check_branch
          %268 = sbr.rel (%p266) target = $region28
        $region27: #{kmeans_rnn_agent_forward.1} parent=11 // pred_region
          _
        $region28: #{kmeans_rnn_agent_forward.1} parent=11 // pred_fallthru
          _
        // Predicated region
        $region29: #{kmeans_rnn_agent_forward.1} parent=11 // pred_check
          %p269 = pneg %p174
        $region30: #{kmeans_rnn_agent_forward.1} parent=11 // pred_check_branch
          %271 = sbr.rel (%p269) target = $region32
        $region31: #{kmeans_rnn_agent_forward.1} parent=11 // pred_region
          %s273 = ssub.s32 7168, 7168
          %274 = vsyncadd [#allocation3], %s273
          %s275 = sshll.u32 [#allocation2], 4
          %s276 = int_to_ptr.vmem [resolvable:$true] %s275
          %281 = dma.hbm_to_vmem [thread:$0]  %s6, 7168, %s276, [#allocation3], 448, 448, 28
        $region32: #{kmeans_rnn_agent_forward.1} parent=11 // pred_fallthru
          _
        // Predicated region
        $region33: #{kmeans_rnn_agent_forward.1} parent=11 // pred_check
          %p282 = pneg %p195
        $region34: #{kmeans_rnn_agent_forward.1} parent=11 // pred_check_branch
          %284 = sbr.rel (%p282) target = $region36
        $region35: #{kmeans_rnn_agent_forward.1} parent=11 // pred_region
          _
        $region36: #{kmeans_rnn_agent_forward.1} parent=11 // pred_fallthru
          _
      $region12: #{kmeans_rnn_agent_forward.1} parent=5 // pred_fallthru
        _
      %p285 = scmp.lt.s32.totalorder %s17, 4
      // Predicated region
      $region37: #{kmeans_rnn_agent_forward.1} parent=5 // pred_check
        %p286 = pneg %p285
      $region38: #{kmeans_rnn_agent_forward.1} parent=5 // pred_check_branch
        %288 = sbr.rel (%p286) target = $region40
      $region39: #{kmeans_rnn_agent_forward.1} parent=5 // pred_region
        // Predicated region
        $region41: #{kmeans_rnn_agent_forward.1} parent=39 // pred_check
          %p289 = pneg %p37
        $region42: #{kmeans_rnn_agent_forward.1} parent=39 // pred_check_branch
          %291 = sbr.rel (%p289) target = $region44
        $region43: #{kmeans_rnn_agent_forward.1} parent=39 // pred_region
          %p292 = scmp.lt.s32.totalorder %s17, 3
          %s293 = scalar_select %p292, %s17, 3
          %s294 = smul.addr %s293, 4
          %s295 = scalar_lea.vmem %s0, %s294
        $region44: #{kmeans_rnn_agent_forward.1} parent=39 // pred_fallthru
          _
        // Predicated region
        $region45: #{kmeans_rnn_agent_forward.1} parent=39 // pred_check
          %p296 = pneg %p105
        $region46: #{kmeans_rnn_agent_forward.1} parent=39 // pred_check_branch
          %298 = sbr.rel (%p296) target = $region48
        $region47: #{kmeans_rnn_agent_forward.1} parent=39 // pred_region
          %p299 = scmp.lt.s32.totalorder %s17, 3
          %s300 = scalar_select %p299, %s17, 3
          %s301 = smul.addr %s300, 4
          %s302 = scalar_lea.vmem %s3, %s301
        $region48: #{kmeans_rnn_agent_forward.1} parent=39 // pred_fallthru
          _
      $region40: #{kmeans_rnn_agent_forward.1} parent=5 // pred_fallthru
        _
      %p303 = scmp.le.s32.totalorder 1, %s17
      %p304 = scmp.lt.s32.totalorder %s17, 5
      %p305 = pnand %p303, %p304
      %p306 = pneg %p305
      // Predicated region
      $region49: #{kmeans_rnn_agent_forward.1} parent=5 // pred_check
        _
      $region50: #{kmeans_rnn_agent_forward.1} parent=5 // pred_check_branch
        %308 = sbr.rel (%p305) target = $region52
      $region51: #{kmeans_rnn_agent_forward.1} parent=5 // pred_region
        %s309 = ssub.s32 %s17, 1
        // Predicated region
        $region53: #{kmeans_rnn_agent_forward.1} parent=51 // pred_check
          %p310 = pneg %p174
        $region54: #{kmeans_rnn_agent_forward.1} parent=51 // pred_check_branch
          %312 = sbr.rel (%p310) target = $region56
        $region55: #{kmeans_rnn_agent_forward.1} parent=51 // pred_region
          %313 = dma.done [#allocation3], 7168
        $region56: #{kmeans_rnn_agent_forward.1} parent=51 // pred_fallthru
          _
        %p314 = scmp.lt.s32.totalorder %s22, 3
        %s315 = scalar_select %p314, %s22, 3
        %s316 = smul.addr %s315, 4
        %s317 = scalar_lea.vmem %s0, %s316
        %p318 = pneg %p43
        %p319 = pneg %p40
        %p320 = pneg %p64
        %p321 = pneg %p61
        %p322 = pneg %p85
        %p323 = pneg %p82
        %p324 = scmp.lt.s32.totalorder %s22, 3
        %s325 = scalar_select %p324, %s22, 3
        %s326 = smul.addr %s325, 4
        %s327 = scalar_lea.vmem %s3, %s326
        %p328 = pneg %p111
        %p329 = pneg %p108
        %p330 = pneg %p132
        %p331 = pneg %p129
        %p332 = pneg %p153
        %p333 = pneg %p150
        %p334 = pneg %p174
        %p335 = pneg %p171
        %p336 = pneg %p195
        %p337 = pneg %p192
        %p338 = pneg %p221
        %p339 = pneg %p218
        %p340 = scmp.lt.s32.totalorder %s22, 3
        %s341 = scalar_select %p340, %s22, 3
        %s342 = smul.addr %s341, 8
        %s343 = scalar_lea.vmem %s8, %s342
        %p344 = pneg %p242
        %p345 = pneg %p239
        %p346 = scmp.lt.s32.totalorder %s22, 3
        %s347 = scalar_select %p346, %s22, 3
        %s348 = smul.addr %s347, 4
        %s349 = scalar_lea.vmem %s0, %s348
        %p350 = scmp.lt.s32.totalorder %s22, 3
        %s351 = scalar_select %p350, %s22, 3
        %s352 = smul.addr %s351, 4
        %s353 = scalar_lea.vmem %s3, %s352
        %p354 = scmp.lt.s32.totalorder %s22, 3
        %s355 = scalar_select %p354, %s22, 3
        %s356 = smul.addr %s355, 8
        %s357 = scalar_lea.vmem %s8, %s356
        %p359 = scmp.eq.s32.totalorder %s22, 0
        // Predicated region
        $region57: #{kmeans_rnn_agent_forward.1} parent=51 // pred_check
          %p360 = pneg %p359
        $region58: #{kmeans_rnn_agent_forward.1} parent=51 // pred_check_branch
          %362 = sbr.rel (%p360) target = $region60
        $region59: #{kmeans_rnn_agent_forward.1} parent=51 // pred_region
          %v363 = vld [vmem:[%s4] sm:$0xff]
          %364 = vst [vmem:[%s9] sm:$0xff] %v363
        $region60: #{kmeans_rnn_agent_forward.1} parent=51 // pred_fallthru
          _
        %v365 = vld [vmem:[%s349] sm:$0xf]
        %v366 = vld [vmem:[%s2] sm:$0x1]
        %v367 = vld [vmem:[%s1] sm:$0xff]
        %v368 = vld [vmem:[%s1 + $0x8] sm:$0xff]
        %vm369 = vcmask 130048
        %v371 = vsel %vm369, %v365, 0
        %373 = vmatprep.subr.mxu0 0.0
        %374 = vmatpush1.msra.mxu0 0.0
        %375 = vmatprep.subr.mxu0 0.0
        %376 = vmatpush1.msra.mxu0 0.0
        %377 = vmatprep.subr.mxu0 0.0
        %378 = vmatpush1.msra.mxu0 0.0
        %379 = vmatprep.subr.mxu0 0.0
        %380 = vmatpush1.msra.mxu0 0.0
        %381 = vmatprep.subr.mxu0 0.0
        %382 = vmatpush1.msra.mxu0 0.0
        %383 = vmatprep.subr.mxu0 0.0
        %384 = vmatpush1.msra.mxu0 0.0
        %385 = vmatprep.subr.mxu0 0.0
        %386 = vmatpush1.msra.mxu0 0.0
        %387 = vmatprep.subr.mxu0 0.0
        %388 = vmatpush1.msra.mxu0 0.0
        %389 = vmatprep.subr.mxu0 0.0
        %390 = vmatpush1.msra.mxu0 0.0
        %391 = vmatprep.subr.mxu0 0.0
        %392 = vmatpush1.msra.mxu0 0.0
        %393 = vmatprep.subr.mxu0 0.0
        %394 = vmatpush1.msra.mxu0 0.0
        %395 = vmatprep.subr.mxu0 0.0
        %396 = vmatpush1.msra.mxu0 0.0
        %397 = vmatprep.subr.mxu0 0.0
        %398 = vmatpush1.msra.mxu0 0.0
        %399 = vmatprep.subr.mxu0 0.0
        %400 = vmatpush1.msra.mxu0 0.0
        %401 = vmatprep.subr.mxu0 0.0
        %402 = vmatpush1.msra.mxu0 %v368
        %403 = vmatprep.subr.mxu0 0.0
        %404 = vmatpush1.msra.mxu0 %v367
        %405 = vmatprep.subr.mxu0 0.0
        %406 = vmatpush2.msra.mxu0 0.0
        %407 = vmatprep.subr.mxu0 0.0
        %408 = vmatpush2.msra.mxu0 0.0
        %409 = vmatprep.subr.mxu0 0.0
        %410 = vmatpush2.msra.mxu0 0.0
        %411 = vmatprep.subr.mxu0 0.0
        %412 = vmatpush2.msra.mxu0 0.0
        %413 = vmatprep.subr.mxu0 0.0
        %414 = vmatpush2.msra.mxu0 0.0
        %415 = vmatprep.subr.mxu0 0.0
        %416 = vmatpush2.msra.mxu0 0.0
        %417 = vmatprep.subr.mxu0 0.0
        %418 = vmatpush2.msra.mxu0 0.0
        %419 = vmatprep.subr.mxu0 0.0
        %420 = vmatpush2.msra.mxu0 0.0
        %421 = vmatprep.subr.mxu0 0.0
        %422 = vmatpush2.msra.mxu0 0.0
        %423 = vmatprep.subr.mxu0 0.0
        %424 = vmatpush2.msra.mxu0 0.0
        %425 = vmatprep.subr.mxu0 0.0
        %426 = vmatpush2.msra.mxu0 0.0
        %427 = vmatprep.subr.mxu0 0.0
        %428 = vmatpush2.msra.mxu0 0.0
        %429 = vmatprep.subr.mxu0 0.0
        %430 = vmatpush2.msra.mxu0 0.0
        %431 = vmatprep.subr.mxu0 0.0
        %432 = vmatpush2.msra.mxu0 0.0
        %433 = vmatprep.subr.mxu0 0.0
        %434 = vmatpush2.msra.mxu0 0.0
        %435 = vmatprep.subr.mxu0 0.0
        %436 = vmatpush2.msra.mxu0 0.0
        %437 = vmatprep.mubr.f32.mxu0 0.0
        %438 = vmatmul.mubr.f32.gmra.mxu0 %v371
        %v439 = vpop.f32.mrf.mxu0
        %v440 = vadd.f32 0.0, %v439
        %v441 = vpop.f32.mrf.mxu0
        %442 = vdwg.mxu0
        %v443 = vmul.f32 %v440, 2.0
        %v445 = vlaneseq
        %v446 = vshrl.u32 %v445, 7
        %v447 = vsub.s32 0, %v446
        %v448 = vrot.slane %v366, %v447
        %v450 = vsub.f32 %v448, %v443
        %vm451 = vcmask 19456
        %v452 = vsel %vm451, %v450, inf
        %453 = vmin.xlane.f32.xlu0 %v452
        %v454 = vpop.xlane.xlu0 %453
        %v455 = vlaneseq
        %v456 = vand.u32 %v455, 127
        %vm457 = vcmp.le.f32.partialorder %v450, %v454
        %v458 = vsel %vm457, %v456, 3
        %v459 = vsel %vm451, %v458, 2147483647
        %v460 = vand.u32 %v459, 65535
        %v461 = vshra.s32 %v459, 16
        %v462 = vcvt.s32.f32 %v460
        %v463 = vcvt.s32.f32 %v461
        %464 = vmin.xlane.f32.xlu0 %v463
        %v465 = vpop.xlane.xlu0 %464
        %vm466 = vcmp.eq.f32.partialorder %v463, %v465
        %v467 = vsel %vm466, %v462, inf
        %468 = vmin.xlane.f32.xlu0 %v467
        %v469 = vpop.xlane.xlu0 %468
        %v470 = vcvt.f32.s32 %v469
        %v471 = vcvt.f32.s32 %v465
        %v472 = vshll.u32 %v471, 16
        %v473 = vadd.s32 %v472, %v470
        %v474 = vmul.u32 %v473, 8
        %vm475 = vcmp.ge.s32.totalorder %v456, %v474
        %v476 = vadd.s32 %v474, 8
        %vm477 = vcmp.lt.s32.totalorder %v456, %v476
        %vm478 = vmand %vm475, %vm477
        %v479 = vsel %vm478, 1, 0
        %v480 = vcvt.s32.f32 %v479
        %v481 = vlaneseq
        %v482 = vshrl.u32 %v481, 7
        %v483 = vmul.u32 %v456, 2
        %vm484 = vcmp.ge.s32.totalorder %v482, %v483
        %v485 = vadd.s32 %v456, 1
        %v486 = vmul.u32 %v485, 2
        %vm487 = vcmp.lt.s32.totalorder %v482, %v486
        %vm488 = vmand %vm484, %vm487
        %v489 = vsel %vm488, 1, 0
        %v490 = vcvt.s32.f32 %v489
        %vm491 = vcmask 31744
        %v493 = vsel %vm491, %v490, 0
        %vm495 = vcmask 1043456
        %v497 = vsel %vm495, %v480, 0
        %499 = vmatprep.subr.mxu0 0.0
        %500 = vmatpush1.msra.mxu0 0.0
        %501 = vmatprep.subr.mxu0 0.0
        %502 = vmatpush1.msra.mxu0 0.0
        %503 = vmatprep.subr.mxu0 0.0
        %504 = vmatpush1.msra.mxu0 0.0
        %505 = vmatprep.subr.mxu0 0.0
        %506 = vmatpush1.msra.mxu0 0.0
        %507 = vmatprep.subr.mxu0 0.0
        %508 = vmatpush1.msra.mxu0 0.0
        %509 = vmatprep.subr.mxu0 0.0
        %510 = vmatpush1.msra.mxu0 0.0
        %511 = vmatprep.subr.mxu0 0.0
        %512 = vmatpush1.msra.mxu0 0.0
        %513 = vmatprep.subr.mxu0 0.0
        %514 = vmatpush1.msra.mxu0 0.0
        %515 = vmatprep.subr.mxu0 0.0
        %516 = vmatpush1.msra.mxu0 0.0
        %517 = vmatprep.subr.mxu0 0.0
        %518 = vmatpush1.msra.mxu0 0.0
        %519 = vmatprep.subr.mxu0 0.0
        %520 = vmatpush1.msra.mxu0 0.0
        %521 = vmatprep.subr.mxu0 0.0
        %522 = vmatpush1.msra.mxu0 0.0
        %523 = vmatprep.subr.mxu0 0.0
        %524 = vmatpush1.msra.mxu0 0.0
        %525 = vmatprep.subr.mxu0 0.0
        %526 = vmatpush1.msra.mxu0 0.0
        %527 = vmatprep.subr.mxu0 0.0
        %528 = vmatpush1.msra.mxu0 0.0
        %529 = vmatprep.subr.mxu0 0.0
        %530 = vmatpush1.msra.mxu0 %v497
        %531 = vmatprep.subr.mxu0 0.0
        %532 = vmatpush2.msra.mxu0 0.0
        %533 = vmatprep.subr.mxu0 0.0
        %534 = vmatpush2.msra.mxu0 0.0
        %535 = vmatprep.subr.mxu0 0.0
        %536 = vmatpush2.msra.mxu0 0.0
        %537 = vmatprep.subr.mxu0 0.0
        %538 = vmatpush2.msra.mxu0 0.0
        %539 = vmatprep.subr.mxu0 0.0
        %540 = vmatpush2.msra.mxu0 0.0
        %541 = vmatprep.subr.mxu0 0.0
        %542 = vmatpush2.msra.mxu0 0.0
        %543 = vmatprep.subr.mxu0 0.0
        %544 = vmatpush2.msra.mxu0 0.0
        %545 = vmatprep.subr.mxu0 0.0
        %546 = vmatpush2.msra.mxu0 0.0
        %547 = vmatprep.subr.mxu0 0.0
        %548 = vmatpush2.msra.mxu0 0.0
        %549 = vmatprep.subr.mxu0 0.0
        %550 = vmatpush2.msra.mxu0 0.0
        %551 = vmatprep.subr.mxu0 0.0
        %552 = vmatpush2.msra.mxu0 0.0
        %553 = vmatprep.subr.mxu0 0.0
        %554 = vmatpush2.msra.mxu0 0.0
        %555 = vmatprep.subr.mxu0 0.0
        %556 = vmatpush2.msra.mxu0 0.0
        %557 = vmatprep.subr.mxu0 0.0
        %558 = vmatpush2.msra.mxu0 0.0
        %559 = vmatprep.subr.mxu0 0.0
        %560 = vmatpush2.msra.mxu0 0.0
        %561 = vmatprep.subr.mxu0 0.0
        %562 = vmatpush2.msra.mxu0 0.0
        %563 = vmatprep.mubr.f32.mxu0 0.0
        %564 = vmatmul.mubr.f32.gmra.mxu0 %v493
        %v565 = vpop.f32.mrf.mxu0
        %v566 = vadd.f32 0.0, %v565
        %v567 = vpop.f32.mrf.mxu0
        %568 = vdwg.mxu0
        %v569 = vld [vmem:[%s353] sm:$0xf]
        %v570 = vld [vmem:[%s9] sm:$0xff]
        %v571 = vpack.c.bf16 %v570, %v570
        %v572 = vld [vmem:[%s7] sm:$0x1]
        %v573 = vld [vmem:[%s7 + $0x1] sm:$0x7]
        %v574 = vld [vmem:[%s7 + $0x4] sm:$0x7]
        %v575 = vld [vmem:[%s7 + $0x7] sm:$0x1]
        %v576 = vld [vmem:[%s5] sm:$0xf]
        %v577 = vld [vmem:[%s5 + $0x4] sm:$0xf]
        %v579 = vlaneseq
        %v580 = vshrl.u32 %v579, 7
        %v581 = vsub.s32 0, %v580
        %v582 = vrot.slane %v572, %v581
        %v586 = vunpack.c.l.b16 %v576
        %v587 = vunpack.c.l.b16 %v577
        %v588 = vpack.c.b16 %v587, %v586
        %v591 = vsel %vm369, %v569, 0
        %593 = vmatprep.subr.bf16.mxu0 0
        %594 = vmatpush1.bf16.msra.mxu0 0
        %595 = vmatprep.subr.bf16.mxu0 0
        %596 = vmatpush1.bf16.msra.mxu0 0
        %597 = vmatprep.subr.bf16.mxu0 0
        %598 = vmatpush1.bf16.msra.mxu0 0
        %599 = vmatprep.subr.bf16.mxu0 0
        %600 = vmatpush1.bf16.msra.mxu0 0
        %601 = vmatprep.subr.bf16.mxu0 0
        %602 = vmatpush1.bf16.msra.mxu0 0
        %603 = vmatprep.subr.bf16.mxu0 0
        %604 = vmatpush1.bf16.msra.mxu0 0
        %605 = vmatprep.subr.bf16.mxu0 0
        %606 = vmatpush1.bf16.msra.mxu0 0
        %607 = vmatprep.subr.bf16.mxu0 0
        %608 = vmatpush1.bf16.msra.mxu0 %v588
        %609 = vmatprep.subr.bf16.mxu0 0
        %610 = vmatpush2.bf16.msra.mxu0 0
        %611 = vmatprep.subr.bf16.mxu0 0
        %612 = vmatpush2.bf16.msra.mxu0 0
        %613 = vmatprep.subr.bf16.mxu0 0
        %614 = vmatpush2.bf16.msra.mxu0 0
        %615 = vmatprep.subr.bf16.mxu0 0
        %616 = vmatpush2.bf16.msra.mxu0 0
        %617 = vmatprep.subr.bf16.mxu0 0
        %618 = vmatpush2.bf16.msra.mxu0 0
        %619 = vmatprep.subr.bf16.mxu0 0
        %620 = vmatpush2.bf16.msra.mxu0 0
        %621 = vmatprep.subr.bf16.mxu0 0
        %622 = vmatpush2.bf16.msra.mxu0 0
        %623 = vmatprep.subr.bf16.mxu0 0
        %624 = vmatpush2.bf16.msra.mxu0 0
        %625 = vmatprep.mubr.bf16.mxu0 0
        %626 = vmatmul.mubr.bf16.gmra.mxu0 %v591
        %v627 = vpop.f32.mrf.mxu0
        %v628 = vadd.f32 %v582, %v627
        %v629 = vpop.f32.mrf.mxu0
        %v630 = vpop.f32.mrf.mxu0
        %v631 = vpop.f32.mrf.mxu0
        %632 = vdwg.mxu0
        %v633 = vmax.f32 %v628, 0.0
        %v634 = vpack.c.bf16 %v633, %v633
        %v635 = vld [vmem:[#allocation2] sm:$0xff]
        %v636 = vld [vmem:[#allocation2 + $0x8] sm:$0xf]
        %v637 = vld [vmem:[#allocation2 + $0x1c] sm:$0xff]
        %v638 = vld [vmem:[#allocation2 + $0x24] sm:$0xf]
        %v639 = vld [vmem:[#allocation2 + $0x38] sm:$0xff]
        %v640 = vld [vmem:[#allocation2 + $0x40] sm:$0xf]
        %v641 = vld [vmem:[#allocation2 + $0x54] sm:$0xff]
        %v642 = vld [vmem:[#allocation2 + $0x5c] sm:$0xf]
        %v643 = vld [vmem:[#allocation2 + $0x70] sm:$0xff]
        %v644 = vld [vmem:[#allocation2 + $0x78] sm:$0xf]
        %v645 = vld [vmem:[#allocation2 + $0x8c] sm:$0xff]
        %v646 = vld [vmem:[#allocation2 + $0x94] sm:$0xf]
        %v647 = vld [vmem:[#allocation2 + $0xa8] sm:$0xff]
        %v648 = vld [vmem:[#allocation2 + $0xb0] sm:$0xf]
        %v649 = vld [vmem:[#allocation2 + $0xc4] sm:$0xff]
        %v650 = vld [vmem:[#allocation2 + $0xcc] sm:$0xf]
        %v651 = vld [vmem:[#allocation2 + $0xe0] sm:$0xff]
        %v652 = vld [vmem:[#allocation2 + $0xe8] sm:$0xf]
        %v653 = vld [vmem:[#allocation2 + $0xfc] sm:$0xff]
        %v654 = vld [vmem:[#allocation2 + $0x104] sm:$0xf]
        %v655 = vld [vmem:[#allocation2 + $0x118] sm:$0xff]
        %v656 = vld [vmem:[#allocation2 + $0x120] sm:$0xf]
        %v657 = vld [vmem:[#allocation2 + $0x134] sm:$0xff]
        %v658 = vld [vmem:[#allocation2 + $0x13c] sm:$0xf]
        %v659 = vld [vmem:[#allocation2 + $0x150] sm:$0xff]
        %v660 = vld [vmem:[#allocation2 + $0x158] sm:$0xf]
        %v661 = vld [vmem:[#allocation2 + $0x16c] sm:$0xff]
        %v662 = vld [vmem:[#allocation2 + $0x174] sm:$0xf]
        %v663 = vld [vmem:[#allocation2 + $0x188] sm:$0xff]
        %v664 = vld [vmem:[#allocation2 + $0x190] sm:$0xf]
        %v665 = vld [vmem:[#allocation2 + $0x1a4] sm:$0xff]
        %v666 = vld [vmem:[#allocation2 + $0x1ac] sm:$0xf]
        %v668 = vlaneseq
        %v669 = vshrl.u32 %v668, 7
        %v670 = vsub.s32 0, %v669
        %v671 = vrot.slane %v573, %v670
        %v672 = vlaneseq
        %v673 = vshrl.u32 %v672, 7
        %v674 = vsub.s32 1, %v673
        %v675 = vrot.slane %v573, %v674
        %v676 = vlaneseq
        %v677 = vshrl.u32 %v676, 7
        %v678 = vsub.s32 2, %v677
        %v679 = vrot.slane %v573, %v678
        %v715 = vunpack.c.l.b16 %v635
        %v716 = vunpack.c.h.b16 %v635
        %v717 = vunpack.c.l.b16 %v636
        %v718 = vunpack.c.l.b16 %v637
        %v719 = vunpack.c.h.b16 %v637
        %v720 = vunpack.c.l.b16 %v638
        %v721 = vunpack.c.l.b16 %v639
        %v722 = vunpack.c.h.b16 %v639
        %v723 = vunpack.c.l.b16 %v640
        %v724 = vunpack.c.l.b16 %v641
        %v725 = vunpack.c.h.b16 %v641
        %v726 = vunpack.c.l.b16 %v642
        %v727 = vunpack.c.l.b16 %v643
        %v728 = vunpack.c.h.b16 %v643
        %v729 = vunpack.c.l.b16 %v644
        %v730 = vunpack.c.l.b16 %v645
        %v731 = vunpack.c.h.b16 %v645
        %v732 = vunpack.c.l.b16 %v646
        %v733 = vunpack.c.l.b16 %v647
        %v734 = vunpack.c.h.b16 %v647
        %v735 = vunpack.c.l.b16 %v648
        %v736 = vunpack.c.l.b16 %v649
        %v737 = vunpack.c.h.b16 %v649
        %v738 = vunpack.c.l.b16 %v650
        %v739 = vunpack.c.l.b16 %v651
        %v740 = vunpack.c.h.b16 %v651
        %v741 = vunpack.c.l.b16 %v652
        %v742 = vunpack.c.l.b16 %v653
        %v743 = vunpack.c.h.b16 %v653
        %v744 = vunpack.c.l.b16 %v654
        %v745 = vunpack.c.l.b16 %v655
        %v746 = vunpack.c.h.b16 %v655
        %v747 = vunpack.c.l.b16 %v656
        %v748 = vunpack.c.l.b16 %v657
        %v749 = vunpack.c.h.b16 %v657
        %v750 = vunpack.c.l.b16 %v658
        %v751 = vunpack.c.l.b16 %v659
        %v752 = vunpack.c.h.b16 %v659
        %v753 = vunpack.c.l.b16 %v660
        %v754 = vunpack.c.l.b16 %v661
        %v755 = vunpack.c.h.b16 %v661
        %v756 = vunpack.c.l.b16 %v662
        %v757 = vunpack.c.l.b16 %v663
        %v758 = vunpack.c.h.b16 %v663
        %v759 = vunpack.c.l.b16 %v664
        %v760 = vunpack.c.l.b16 %v665
        %v761 = vunpack.c.h.b16 %v665
        %v762 = vunpack.c.l.b16 %v666
        %v763 = vpack.c.b16 %v718, %v715
        %v764 = vpack.c.b16 %v719, %v716
        %v765 = vpack.c.b16 %v720, %v717
        %v766 = vpack.c.b16 %v724, %v721
        %v767 = vpack.c.b16 %v725, %v722
        %v768 = vpack.c.b16 %v726, %v723
        %v769 = vpack.c.b16 %v730, %v727
        %v770 = vpack.c.b16 %v731, %v728
        %v771 = vpack.c.b16 %v732, %v729
        %v772 = vpack.c.b16 %v736, %v733
        %v773 = vpack.c.b16 %v737, %v734
        %v774 = vpack.c.b16 %v738, %v735
        %v775 = vpack.c.b16 %v742, %v739
        %v776 = vpack.c.b16 %v743, %v740
        %v777 = vpack.c.b16 %v744, %v741
        %v778 = vpack.c.b16 %v748, %v745
        %v779 = vpack.c.b16 %v749, %v746
        %v780 = vpack.c.b16 %v750, %v747
        %v781 = vpack.c.b16 %v754, %v751
        %v782 = vpack.c.b16 %v755, %v752
        %v783 = vpack.c.b16 %v756, %v753
        %v784 = vpack.c.b16 %v760, %v757
        %v785 = vpack.c.b16 %v761, %v758
        %v786 = vpack.c.b16 %v762, %v759
        %811 = vmatprep.subr.bf16.mxu0 %v785
        %812 = vmatpush1.bf16.msra.mxu0 %v784
        %813 = vmatprep.subr.bf16.mxu0 %v782
        %814 = vmatpush1.bf16.msra.mxu0 %v781
        %815 = vmatprep.subr.bf16.mxu0 %v779
        %816 = vmatpush1.bf16.msra.mxu0 %v778
        %817 = vmatprep.subr.bf16.mxu0 %v776
        %818 = vmatpush1.bf16.msra.mxu0 %v775
        %819 = vmatprep.subr.bf16.mxu0 %v773
        %820 = vmatpush1.bf16.msra.mxu0 %v772
        %821 = vmatprep.subr.bf16.mxu0 %v770
        %822 = vmatpush1.bf16.msra.mxu0 %v769
        %823 = vmatprep.subr.bf16.mxu0 %v767
        %824 = vmatpush1.bf16.msra.mxu0 %v766
        %825 = vmatprep.subr.bf16.mxu0 %v764
        %826 = vmatpush1.bf16.msra.mxu0 %v763
        %827 = vmatprep.subr.bf16.mxu0 0
        %828 = vmatpush2.bf16.msra.mxu0 0
        %829 = vmatprep.subr.bf16.mxu0 0
        %830 = vmatpush2.bf16.msra.mxu0 0
        %831 = vmatprep.subr.bf16.mxu0 0
        %832 = vmatpush2.bf16.msra.mxu0 0
        %833 = vmatprep.subr.bf16.mxu0 0
        %834 = vmatpush2.bf16.msra.mxu0 0
        %835 = vmatprep.subr.bf16.mxu0 0
        %836 = vmatpush2.bf16.msra.mxu0 0
        %837 = vmatprep.subr.bf16.mxu0 0
        %838 = vmatpush2.bf16.msra.mxu0 0
        %839 = vmatprep.subr.bf16.mxu0 0
        %840 = vmatpush2.bf16.msra.mxu0 0
        %841 = vmatprep.subr.bf16.mxu0 0
        %842 = vmatpush2.bf16.msra.mxu0 0
        %843 = vmatprep.mubr.bf16.mxu0 0
        %844 = vmatmul.mubr.bf16.gmra.mxu0 %v634
        %v845 = vpop.f32.mrf.mxu0
        %v846 = vadd.f32 %v671, %v845
        %v847 = vpop.f32.mrf.mxu0
        %v848 = vadd.f32 %v675, %v847
        %v849 = vpop.f32.mrf.mxu0
        %v850 = vpop.f32.mrf.mxu0
        %851 = vdwg.mxu0
        %852 = vmatprep.subr.bf16.mxu0 0
        %853 = vmatpush1.bf16.msra.mxu0 %v786
        %854 = vmatprep.subr.bf16.mxu0 0
        %855 = vmatpush1.bf16.msra.mxu0 %v783
        %856 = vmatprep.subr.bf16.mxu0 0
        %857 = vmatpush1.bf16.msra.mxu0 %v780
        %858 = vmatprep.subr.bf16.mxu0 0
        %859 = vmatpush1.bf16.msra.mxu0 %v777
        %860 = vmatprep.subr.bf16.mxu0 0
        %861 = vmatpush1.bf16.msra.mxu0 %v774
        %862 = vmatprep.subr.bf16.mxu0 0
        %863 = vmatpush1.bf16.msra.mxu0 %v771
        %864 = vmatprep.subr.bf16.mxu0 0
        %865 = vmatpush1.bf16.msra.mxu0 %v768
        %866 = vmatprep.subr.bf16.mxu0 0
        %867 = vmatpush1.bf16.msra.mxu0 %v765
        %868 = vmatprep.subr.bf16.mxu0 0
        %869 = vmatpush2.bf16.msra.mxu0 0
        %870 = vmatprep.subr.bf16.mxu0 0
        %871 = vmatpush2.bf16.msra.mxu0 0
        %872 = vmatprep.subr.bf16.mxu0 0
        %873 = vmatpush2.bf16.msra.mxu0 0
        %874 = vmatprep.subr.bf16.mxu0 0
        %875 = vmatpush2.bf16.msra.mxu0 0
        %876 = vmatprep.subr.bf16.mxu0 0
        %877 = vmatpush2.bf16.msra.mxu0 0
        %878 = vmatprep.subr.bf16.mxu0 0
        %879 = vmatpush2.bf16.msra.mxu0 0
        %880 = vmatprep.subr.bf16.mxu0 0
        %881 = vmatpush2.bf16.msra.mxu0 0
        %882 = vmatprep.subr.bf16.mxu0 0
        %883 = vmatpush2.bf16.msra.mxu0 0
        %884 = vmatprep.mubr.bf16.mxu0 0
        %885 = vmatmul.mubr.bf16.gmra.mxu0 %v634
        %v886 = vpop.f32.mrf.mxu0
        %v887 = vadd.f32 %v679, %v886
        %v888 = vpop.f32.mrf.mxu0
        %v889 = vpop.f32.mrf.mxu0
        %v890 = vpop.f32.mrf.mxu0
        %891 = vdwg.mxu0
        %v892 = vld [vmem:[#allocation2 + $0xc] sm:$0xff]
        %v893 = vld [vmem:[#allocation2 + $0x14] sm:$0xf]
        %v894 = vld [vmem:[#allocation2 + $0x28] sm:$0xff]
        %v895 = vld [vmem:[#allocation2 + $0x30] sm:$0xf]
        %v896 = vld [vmem:[#allocation2 + $0x44] sm:$0xff]
        %v897 = vld [vmem:[#allocation2 + $0x4c] sm:$0xf]
        %v898 = vld [vmem:[#allocation2 + $0x60] sm:$0xff]
        %v899 = vld [vmem:[#allocation2 + $0x68] sm:$0xf]
        %v900 = vld [vmem:[#allocation2 + $0x7c] sm:$0xff]
        %v901 = vld [vmem:[#allocation2 + $0x84] sm:$0xf]
        %v902 = vld [vmem:[#allocation2 + $0x98] sm:$0xff]
        %v903 = vld [vmem:[#allocation2 + $0xa0] sm:$0xf]
        %v904 = vld [vmem:[#allocation2 + $0xb4] sm:$0xff]
        %v905 = vld [vmem:[#allocation2 + $0xbc] sm:$0xf]
        %v906 = vld [vmem:[#allocation2 + $0xd0] sm:$0xff]
        %v907 = vld [vmem:[#allocation2 + $0xd8] sm:$0xf]
        %v908 = vld [vmem:[#allocation2 + $0xec] sm:$0xff]
        %v909 = vld [vmem:[#allocation2 + $0xf4] sm:$0xf]
        %v910 = vld [vmem:[#allocation2 + $0x108] sm:$0xff]
        %v911 = vld [vmem:[#allocation2 + $0x110] sm:$0xf]
        %v912 = vld [vmem:[#allocation2 + $0x124] sm:$0xff]
        %v913 = vld [vmem:[#allocation2 + $0x12c] sm:$0xf]
        %v914 = vld [vmem:[#allocation2 + $0x140] sm:$0xff]
        %v915 = vld [vmem:[#allocation2 + $0x148] sm:$0xf]
        %v916 = vld [vmem:[#allocation2 + $0x15c] sm:$0xff]
        %v917 = vld [vmem:[#allocation2 + $0x164] sm:$0xf]
        %v918 = vld [vmem:[#allocation2 + $0x178] sm:$0xff]
        %v919 = vld [vmem:[#allocation2 + $0x180] sm:$0xf]
        %v920 = vld [vmem:[#allocation2 + $0x194] sm:$0xff]
        %v921 = vld [vmem:[#allocation2 + $0x19c] sm:$0xf]
        %v922 = vld [vmem:[#allocation2 + $0x1b0] sm:$0xff]
        %v923 = vld [vmem:[#allocation2 + $0x1b8] sm:$0xf]
        %v925 = vlaneseq
        %v926 = vshrl.u32 %v925, 7
        %v927 = vsub.s32 0, %v926
        %v928 = vrot.slane %v574, %v927
        %v929 = vlaneseq
        %v930 = vshrl.u32 %v929, 7
        %v931 = vsub.s32 1, %v930
        %v932 = vrot.slane %v574, %v931
        %v933 = vlaneseq
        %v934 = vshrl.u32 %v933, 7
        %v935 = vsub.s32 2, %v934
        %v936 = vrot.slane %v574, %v935
        %v972 = vunpack.c.l.b16 %v892
        %v973 = vunpack.c.h.b16 %v892
        %v974 = vunpack.c.l.b16 %v893
        %v975 = vunpack.c.l.b16 %v894
        %v976 = vunpack.c.h.b16 %v894
        %v977 = vunpack.c.l.b16 %v895
        %v978 = vunpack.c.l.b16 %v896
        %v979 = vunpack.c.h.b16 %v896
        %v980 = vunpack.c.l.b16 %v897
        %v981 = vunpack.c.l.b16 %v898
        %v982 = vunpack.c.h.b16 %v898
        %v983 = vunpack.c.l.b16 %v899
        %v984 = vunpack.c.l.b16 %v900
        %v985 = vunpack.c.h.b16 %v900
        %v986 = vunpack.c.l.b16 %v901
        %v987 = vunpack.c.l.b16 %v902
        %v988 = vunpack.c.h.b16 %v902
        %v989 = vunpack.c.l.b16 %v903
        %v990 = vunpack.c.l.b16 %v904
        %v991 = vunpack.c.h.b16 %v904
        %v992 = vunpack.c.l.b16 %v905
        %v993 = vunpack.c.l.b16 %v906
        %v994 = vunpack.c.h.b16 %v906
        %v995 = vunpack.c.l.b16 %v907
        %v996 = vunpack.c.l.b16 %v908
        %v997 = vunpack.c.h.b16 %v908
        %v998 = vunpack.c.l.b16 %v909
        %v999 = vunpack.c.l.b16 %v910
        %v1000 = vunpack.c.h.b16 %v910
        %v1001 = vunpack.c.l.b16 %v911
        %v1002 = vunpack.c.l.b16 %v912
        %v1003 = vunpack.c.h.b16 %v912
        %v1004 = vunpack.c.l.b16 %v913
        %v1005 = vunpack.c.l.b16 %v914
        %v1006 = vunpack.c.h.b16 %v914
        %v1007 = vunpack.c.l.b16 %v915
        %v1008 = vunpack.c.l.b16 %v916
        %v1009 = vunpack.c.h.b16 %v916
        %v1010 = vunpack.c.l.b16 %v917
        %v1011 = vunpack.c.l.b16 %v918
        %v1012 = vunpack.c.h.b16 %v918
        %v1013 = vunpack.c.l.b16 %v919
        %v1014 = vunpack.c.l.b16 %v920
        %v1015 = vunpack.c.h.b16 %v920
        %v1016 = vunpack.c.l.b16 %v921
        %v1017 = vunpack.c.l.b16 %v922
        %v1018 = vunpack.c.h.b16 %v922
        %v1019 = vunpack.c.l.b16 %v923
        %v1020 = vpack.c.b16 %v975, %v972
        %v1021 = vpack.c.b16 %v976, %v973
        %v1022 = vpack.c.b16 %v977, %v974
        %v1023 = vpack.c.b16 %v981, %v978
        %v1024 = vpack.c.b16 %v982, %v979
        %v1025 = vpack.c.b16 %v983, %v980
        %v1026 = vpack.c.b16 %v987, %v984
        %v1027 = vpack.c.b16 %v988, %v985
        %v1028 = vpack.c.b16 %v989, %v986
        %v1029 = vpack.c.b16 %v993, %v990
        %v1030 = vpack.c.b16 %v994, %v991
        %v1031 = vpack.c.b16 %v995, %v992
        %v1032 = vpack.c.b16 %v999, %v996
        %v1033 = vpack.c.b16 %v1000, %v997
        %v1034 = vpack.c.b16 %v1001, %v998
        %v1035 = vpack.c.b16 %v1005, %v1002
        %v1036 = vpack.c.b16 %v1006, %v1003
        %v1037 = vpack.c.b16 %v1007, %v1004
        %v1038 = vpack.c.b16 %v1011, %v1008
        %v1039 = vpack.c.b16 %v1012, %v1009
        %v1040 = vpack.c.b16 %v1013, %v1010
        %v1041 = vpack.c.b16 %v1017, %v1014
        %v1042 = vpack.c.b16 %v1018, %v1015
        %v1043 = vpack.c.b16 %v1019, %v1016
        %1068 = vmatprep.subr.bf16.mxu0 %v1042
        %1069 = vmatpush1.bf16.msra.mxu0 %v1041
        %1070 = vmatprep.subr.bf16.mxu0 %v1039
        %1071 = vmatpush1.bf16.msra.mxu0 %v1038
        %1072 = vmatprep.subr.bf16.mxu0 %v1036
        %1073 = vmatpush1.bf16.msra.mxu0 %v1035
        %1074 = vmatprep.subr.bf16.mxu0 %v1033
        %1075 = vmatpush1.bf16.msra.mxu0 %v1032
        %1076 = vmatprep.subr.bf16.mxu0 %v1030
        %1077 = vmatpush1.bf16.msra.mxu0 %v1029
        %1078 = vmatprep.subr.bf16.mxu0 %v1027
        %1079 = vmatpush1.bf16.msra.mxu0 %v1026
        %1080 = vmatprep.subr.bf16.mxu0 %v1024
        %1081 = vmatpush1.bf16.msra.mxu0 %v1023
        %1082 = vmatprep.subr.bf16.mxu0 %v1021
        %1083 = vmatpush1.bf16.msra.mxu0 %v1020
        %1084 = vmatprep.subr.bf16.mxu0 0
        %1085 = vmatpush2.bf16.msra.mxu0 0
        %1086 = vmatprep.subr.bf16.mxu0 0
        %1087 = vmatpush2.bf16.msra.mxu0 0
        %1088 = vmatprep.subr.bf16.mxu0 0
        %1089 = vmatpush2.bf16.msra.mxu0 0
        %1090 = vmatprep.subr.bf16.mxu0 0
        %1091 = vmatpush2.bf16.msra.mxu0 0
        %1092 = vmatprep.subr.bf16.mxu0 0
        %1093 = vmatpush2.bf16.msra.mxu0 0
        %1094 = vmatprep.subr.bf16.mxu0 0
        %1095 = vmatpush2.bf16.msra.mxu0 0
        %1096 = vmatprep.subr.bf16.mxu0 0
        %1097 = vmatpush2.bf16.msra.mxu0 0
        %1098 = vmatprep.subr.bf16.mxu0 0
        %1099 = vmatpush2.bf16.msra.mxu0 0
        %1100 = vmatprep.mubr.bf16.mxu0 0
        %1101 = vmatmul.mubr.bf16.gmra.mxu0 %v571
        %v1102 = vpop.f32.mrf.mxu0
        %v1103 = vadd.f32 %v928, %v1102
        %v1104 = vpop.f32.mrf.mxu0
        %v1105 = vadd.f32 %v932, %v1104
        %v1106 = vpop.f32.mrf.mxu0
        %v1107 = vpop.f32.mrf.mxu0
        %1108 = vdwg.mxu0
        %1109 = vmatprep.subr.bf16.mxu0 0
        %1110 = vmatpush1.bf16.msra.mxu0 %v1043
        %1111 = vmatprep.subr.bf16.mxu0 0
        %1112 = vmatpush1.bf16.msra.mxu0 %v1040
        %1113 = vmatprep.subr.bf16.mxu0 0
        %1114 = vmatpush1.bf16.msra.mxu0 %v1037
        %1115 = vmatprep.subr.bf16.mxu0 0
        %1116 = vmatpush1.bf16.msra.mxu0 %v1034
        %1117 = vmatprep.subr.bf16.mxu0 0
        %1118 = vmatpush1.bf16.msra.mxu0 %v1031
        %1119 = vmatprep.subr.bf16.mxu0 0
        %1120 = vmatpush1.bf16.msra.mxu0 %v1028
        %1121 = vmatprep.subr.bf16.mxu0 0
        %1122 = vmatpush1.bf16.msra.mxu0 %v1025
        %1123 = vmatprep.subr.bf16.mxu0 0
        %1124 = vmatpush1.bf16.msra.mxu0 %v1022
        %1125 = vmatprep.subr.bf16.mxu0 0
        %1126 = vmatpush2.bf16.msra.mxu0 0
        %1127 = vmatprep.subr.bf16.mxu0 0
        %1128 = vmatpush2.bf16.msra.mxu0 0
        %1129 = vmatprep.subr.bf16.mxu0 0
        %1130 = vmatpush2.bf16.msra.mxu0 0
        %1131 = vmatprep.subr.bf16.mxu0 0
        %1132 = vmatpush2.bf16.msra.mxu0 0
        %1133 = vmatprep.subr.bf16.mxu0 0
        %1134 = vmatpush2.bf16.msra.mxu0 0
        %1135 = vmatprep.subr.bf16.mxu0 0
        %1136 = vmatpush2.bf16.msra.mxu0 0
        %1137 = vmatprep.subr.bf16.mxu0 0
        %1138 = vmatpush2.bf16.msra.mxu0 0
        %1139 = vmatprep.subr.bf16.mxu0 0
        %1140 = vmatpush2.bf16.msra.mxu0 0
        %1141 = vmatprep.mubr.bf16.mxu0 0
        %1142 = vmatmul.mubr.bf16.gmra.mxu0 %v571
        %v1143 = vpop.f32.mrf.mxu0
        %v1144 = vadd.f32 %v936, %v1143
        %v1145 = vpop.f32.mrf.mxu0
        %v1146 = vpop.f32.mrf.mxu0
        %v1147 = vpop.f32.mrf.mxu0
        %1148 = vdwg.mxu0
        %v1149 = vadd.f32 %v846, %v1103
        %v1150 = vadd.f32 %v848, %v1105
        %v1151 = vxor.u32 %v1149, 2147483648
        %v1152 = vxor.u32 %v1150, 2147483648
        %v1153 = vmul.f32 %v1151, 1.442695
        %v1154 = vpow.pop %v1153
        %v1155 = vmul.f32 %v1152, 1.442695
        %v1156 = vpow.pop %v1155
        %v1157 = vadd.f32 %v1154, 1.0
        %v1158 = vadd.f32 %v1156, 1.0
        %v1159 = vrcp.pop %v1157
        %v1160 = vmul.f32 1.0, %v1159
        %v1161 = vrcp.pop %v1158
        %v1162 = vmul.f32 1.0, %v1161
        %v1163 = vmul.f32 %v1160, %v1144
        %v1164 = vadd.f32 %v887, %v1163
        %v1165 = vtanh.pop %v1164
        %v1166 = vsub.f32 1.0, %v1162
        %v1167 = vmul.f32 %v1166, %v1165
        %v1168 = vmul.f32 %v1162, %v570
        %v1169 = vadd.f32 %v1167, %v1168
        %vm1170 = vcmp.lt.s32.totalorder %v456, 96
        %v1171 = vsel %vm1170, 1, 0
        %v1172 = vcvt.s32.f32 %v1171
        %v1173 = vmul.f32 %v1169, %v1172
        %1174 = vst [vmem:[%s9] sm:$0xff] %v1173
        %v1175 = vpack.c.bf16 %v1173, %v1173
        %v1176 = vld [vmem:[#allocation2 + $0x18] sm:$0xf]
        %v1177 = vld [vmem:[#allocation2 + $0x34] sm:$0xf]
        %v1178 = vld [vmem:[#allocation2 + $0x50] sm:$0xf]
        %v1179 = vld [vmem:[#allocation2 + $0x6c] sm:$0xf]
        %v1180 = vld [vmem:[#allocation2 + $0x88] sm:$0xf]
        %v1181 = vld [vmem:[#allocation2 + $0xa4] sm:$0xf]
        %v1182 = vld [vmem:[#allocation2 + $0xc0] sm:$0xf]
        %v1183 = vld [vmem:[#allocation2 + $0xdc] sm:$0xf]
        %v1184 = vld [vmem:[#allocation2 + $0xf8] sm:$0xf]
        %v1185 = vld [vmem:[#allocation2 + $0x114] sm:$0xf]
        %v1186 = vld [vmem:[#allocation2 + $0x130] sm:$0xf]
        %v1187 = vld [vmem:[#allocation2 + $0x14c] sm:$0xf]
        %v1188 = vld [vmem:[#allocation2 + $0x168] sm:$0xf]
        %v1189 = vld [vmem:[#allocation2 + $0x184] sm:$0xf]
        %v1190 = vld [vmem:[#allocation2 + $0x1a0] sm:$0xf]
        %v1191 = vld [vmem:[#allocation2 + $0x1bc] sm:$0xf]
        %v1193 = vlaneseq
        %v1194 = vshrl.u32 %v1193, 7
        %v1195 = vsub.s32 0, %v1194
        %v1196 = vrot.slane %v575, %v1195
        %v1214 = vunpack.c.l.b16 %v1176
        %v1215 = vunpack.c.l.b16 %v1177
        %v1216 = vunpack.c.l.b16 %v1178
        %v1217 = vunpack.c.l.b16 %v1179
        %v1218 = vunpack.c.l.b16 %v1180
        %v1219 = vunpack.c.l.b16 %v1181
        %v1220 = vunpack.c.l.b16 %v1182
        %v1221 = vunpack.c.l.b16 %v1183
        %v1222 = vunpack.c.l.b16 %v1184
        %v1223 = vunpack.c.l.b16 %v1185
        %v1224 = vunpack.c.l.b16 %v1186
        %v1225 = vunpack.c.l.b16 %v1187
        %v1226 = vunpack.c.l.b16 %v1188
        %v1227 = vunpack.c.l.b16 %v1189
        %v1228 = vunpack.c.l.b16 %v1190
        %v1229 = vunpack.c.l.b16 %v1191
        %v1230 = vpack.c.b16 %v1215, %v1214
        %v1231 = vpack.c.b16 %v1217, %v1216
        %v1232 = vpack.c.b16 %v1219, %v1218
        %v1233 = vpack.c.b16 %v1221, %v1220
        %v1234 = vpack.c.b16 %v1223, %v1222
        %v1235 = vpack.c.b16 %v1225, %v1224
        %v1236 = vpack.c.b16 %v1227, %v1226
        %v1237 = vpack.c.b16 %v1229, %v1228
        %1246 = vmatprep.subr.bf16.mxu0 0
        %1247 = vmatpush1.bf16.msra.mxu0 %v1237
        %1248 = vmatprep.subr.bf16.mxu0 0
        %1249 = vmatpush1.bf16.msra.mxu0 %v1236
        %1250 = vmatprep.subr.bf16.mxu0 0
        %1251 = vmatpush1.bf16.msra.mxu0 %v1235
        %1252 = vmatprep.subr.bf16.mxu0 0
        %1253 = vmatpush1.bf16.msra.mxu0 %v1234
        %1254 = vmatprep.subr.bf16.mxu0 0
        %1255 = vmatpush1.bf16.msra.mxu0 %v1233
        %1256 = vmatprep.subr.bf16.mxu0 0
        %1257 = vmatpush1.bf16.msra.mxu0 %v1232
        %1258 = vmatprep.subr.bf16.mxu0 0
        %1259 = vmatpush1.bf16.msra.mxu0 %v1231
        %1260 = vmatprep.subr.bf16.mxu0 0
        %1261 = vmatpush1.bf16.msra.mxu0 %v1230
        %1262 = vmatprep.subr.bf16.mxu0 0
        %1263 = vmatpush2.bf16.msra.mxu0 0
        %1264 = vmatprep.subr.bf16.mxu0 0
        %1265 = vmatpush2.bf16.msra.mxu0 0
        %1266 = vmatprep.subr.bf16.mxu0 0
        %1267 = vmatpush2.bf16.msra.mxu0 0
        %1268 = vmatprep.subr.bf16.mxu0 0
        %1269 = vmatpush2.bf16.msra.mxu0 0
        %1270 = vmatprep.subr.bf16.mxu0 0
        %1271 = vmatpush2.bf16.msra.mxu0 0
        %1272 = vmatprep.subr.bf16.mxu0 0
        %1273 = vmatpush2.bf16.msra.mxu0 0
        %1274 = vmatprep.subr.bf16.mxu0 0
        %1275 = vmatpush2.bf16.msra.mxu0 0
        %1276 = vmatprep.subr.bf16.mxu0 0
        %1277 = vmatpush2.bf16.msra.mxu0 0
        %1278 = vmatprep.mubr.bf16.mxu0 0
        %1279 = vmatmul.mubr.bf16.gmra.mxu0 %v1175
        %v1280 = vpop.f32.mrf.mxu0
        %v1281 = vadd.f32 %v1196, %v1280
        %v1282 = vpop.f32.mrf.mxu0
        %v1283 = vpop.f32.mrf.mxu0
        %v1284 = vpop.f32.mrf.mxu0
        %1285 = vdwg.mxu0
        %v1286 = vmul.f32 %v1281, %v566
        %1287 = vst [vmem:[%s357] sm:$0xff] %v1286
        %p1288 = scmp.lt.s32.totalorder %s22, 3
        %s1289 = scalar_select %p1288, %s22, 3
        %s1290 = smul.addr %s1289, 8
        %s1291 = scalar_lea.vmem %s8, %s1290
        // Predicated region
        $region61: #{kmeans_rnn_agent_forward.1} parent=51 // pred_check
          %p1292 = pneg %p218
        $region62: #{kmeans_rnn_agent_forward.1} parent=51 // pred_check_branch
          %1294 = sbr.rel (%p1292) target = $region64
        $region63: #{kmeans_rnn_agent_forward.1} parent=51 // pred_region
          _
        $region64: #{kmeans_rnn_agent_forward.1} parent=51 // pred_fallthru
          _
        // Predicated region
        $region65: #{kmeans_rnn_agent_forward.1} parent=51 // pred_check
          %p1295 = pneg %p239
        $region66: #{kmeans_rnn_agent_forward.1} parent=51 // pred_check_branch
          %1297 = sbr.rel (%p1295) target = $region68
        $region67: #{kmeans_rnn_agent_forward.1} parent=51 // pred_region
          _
        $region68: #{kmeans_rnn_agent_forward.1} parent=51 // pred_fallthru
          _
        // Predicated region
        $region69: #{kmeans_rnn_agent_forward.1} parent=51 // pred_check
          %p1298 = pneg %p239
        $region70: #{kmeans_rnn_agent_forward.1} parent=51 // pred_check_branch
          %1300 = sbr.rel (%p1298) target = $region72
        $region71: #{kmeans_rnn_agent_forward.1} parent=51 // pred_region
          _
        $region72: #{kmeans_rnn_agent_forward.1} parent=51 // pred_fallthru
          _
      $region52: #{kmeans_rnn_agent_forward.1} parent=5 // pred_fallthru
        _
      %p1301 = scmp.le.s32.totalorder 2, %s17
      // Predicated region
      $region73: #{kmeans_rnn_agent_forward.1} parent=5 // pred_check
        %p1302 = pneg %p1301
      $region74: #{kmeans_rnn_agent_forward.1} parent=5 // pred_check_branch
        %1304 = sbr.rel (%p1302) target = $region76
      $region75: #{kmeans_rnn_agent_forward.1} parent=5 // pred_region
        %s1305 = ssub.s32 %s17, 2
        // Predicated region
        $region77: #{kmeans_rnn_agent_forward.1} parent=75 // pred_check
          %p1306 = pneg %p224
        $region78: #{kmeans_rnn_agent_forward.1} parent=75 // pred_check_branch
          %1308 = sbr.rel (%p1306) target = $region80
        $region79: #{kmeans_rnn_agent_forward.1} parent=75 // pred_region
          %p1309 = scmp.lt.s32.totalorder %s23, 3
          %s1310 = scalar_select %p1309, %s23, 3
          %s1311 = smul.addr %s1310, 8
          %s1312 = scalar_lea.vmem %s8, %s1311
        $region80: #{kmeans_rnn_agent_forward.1} parent=75 // pred_fallthru
          _
      $region76: #{kmeans_rnn_agent_forward.1} parent=5 // pred_fallthru
        _
    $region6: #{kmeans_rnn_agent_forward.1} parent=1 // loop_footer
      %s21 = sadd.s32 1, %s17
    $region7: #{kmeans_rnn_agent_forward.1} parent=1 // loop_footer_branch
      %16 = sbr.rel target = $region3
    $region8: #{kmeans_rnn_agent_forward.1} parent=1 // loop_exit
      _
    %1313 = vsyncpa [#allocation3], 1
    %s1314 = scalar_lea.sflag [#allocation3], 1
    %1315 = vsyncpa %s1314, 1

</llo_original>
